<compile_context>
chip_gen: v5e
topology: v5e:2x2
jax: 0.10.0
libtpu: 0.0.40
codegen_flags: <defaults>
</compile_context>

<pallas_src>
import functools
import math

import jax
import jax.numpy as jnp
from jax.experimental import pallas as pl
from jax.experimental.pallas import tpu as pltpu


def _round_up(x, m):
    return (x + m - 1) // m * m


# Conservative per-call VMEM working-set budget: fits the v7x 64 MiB VMEM with
# headroom (v5e/v6e have 128 MiB). The tile picker shrinks tn / tm until the
# double-buffered working set stays under this.
_VMEM_BUDGET = 48 * 2**20
_DEFAULT_SCOPED_VMEM = 32 * 2**20   # Mosaic default scoped VMEM limit


def _working_set_bytes(tm, tn, D, out_itemsize):
    bf16 = 2
    x_b = 2 * tm * D * bf16             # x row tile, double-buffered
    w13_b = 2 * D * (2 * tn) * bf16     # fused w1/w3 tile, double-buffered
    w2_b = 2 * tn * D * bf16            # w2 tile, double-buffered
    out_b = 2 * tm * D * out_itemsize   # output tile, double-buffered
    acc_b = tm * D * 4                  # f32 accumulator scratch
    return x_b + w13_b + w2_b + out_b + acc_b


def _pick_tn(D, H, *, tn_max=512):
    """Hidden-dim tile: as large as possible while streamed weights fit the budget."""
    tn = min(max(128, _round_up(tn_max, 128)), _round_up(H, 128))
    while tn > 128 and _working_set_bytes(256, tn, D, 4) > _VMEM_BUDGET:
        tn = max(128, _round_up(tn // 2, 128))
    return tn


def _pick_tm(M, D, tn, out_itemsize, *, tm_max=256):
    """Row tile: big for MXU utilization, clamped for tiny (decode) batches / VMEM."""
    tm = min(max(8, _round_up(tm_max, 8)), _round_up(M, 8))
    while tm > 64 and _working_set_bytes(tm, tn, D, out_itemsize) > _VMEM_BUDGET:
        tm = max(8, _round_up(tm // 2, 8))
    return tm


def _ffn_kernel(x_ref, w13_ref, w2_ref, o_ref, acc_ref, *, tn):
    """One (tm, D) row tile x one tn-slice of the hidden dim.

    x_ref:   (tm, D)     bf16
    w13_ref: (D, 2*tn)   bf16  -> [w1^T tile | w3^T tile] fused along the output dim
    w2_ref:  (tn, D)     bf16
    o_ref:   (tm, D)     output dtype
    acc_ref: (tm, D)     f32 accumulator across the hidden-dim (reduction) grid axis
    """
    h = pl.program_id(1)

    @pl.when(h == 0)
    def _():
        acc_ref[...] = jnp.zeros_like(acc_ref)

    # Fused gate/up projection: a single MXU contraction covers both w1 and w3.
    g = jnp.dot(x_ref[...], w13_ref[...], preferred_element_type=jnp.float32)
    a = g[:, :tn]
    b = g[:, tn:]
    # SwiGLU epilogue in f32 (sigmoid -> EUP slot, muls -> VPU); one cast at the MXU
    # boundary of the down-projection.
    act = (a * jax.nn.sigmoid(a)) * b

    acc_ref[...] += jnp.dot(act.astype(w2_ref.dtype), w2_ref[...],
                            preferred_element_type=jnp.float32)

    @pl.when(h == pl.num_programs(1) - 1)
    def _():
        o_ref[...] = acc_ref[...].astype(o_ref.dtype)


def prepare_ffn_weights(w1, w2, w3, *, tn=None, dtype=jnp.bfloat16):
    """One-time weight prep (call OUTSIDE the hot path and cache the result):
    transpose to (in, out), zero-pad H to a multiple of the hidden tile, fuse
    w1/w3 tile-wise along the output dim, and cast to bf16.

    w1, w3: (H, D); w2: (D, H)  -- PyTorch (out_features, in_features) layout.
    Returns (w13t (D, 2*H_pad), w2t (H_pad, D), tn).
    Zero-padded hidden units contribute exactly 0 (silu(0)*0 = 0, zero w2 rows).
    """
    H, D = w1.shape
    assert w3.shape == (H, D) and w2.shape == (D, H)
    if tn is None:
        tn = _pick_tn(D, H)
    else:
        tn = min(max(128, _round_up(tn, 128)), _round_up(H, 128))
    H_pad = _round_up(H, tn)

    w1t = jnp.zeros((D, H_pad), w1.dtype).at[:, :H].set(w1.T)
    w3t = jnp.zeros((D, H_pad), w3.dtype).at[:, :H].set(w3.T)
    w2t = jnp.zeros((H_pad, D), w2.dtype).at[:H, :].set(w2.T)

    nH = H_pad // tn
    w13t = jnp.concatenate(
        [w1t.reshape(D, nH, tn), w3t.reshape(D, nH, tn)], axis=2
    ).reshape(D, 2 * H_pad)

    return w13t.astype(dtype), w2t.astype(dtype), tn


def feed_forward(x, w13t, w2t, tn, *, tm=None, vmem_limit_bytes=None):
    """x: (B, S, D). w13t/w2t: prepared via prepare_ffn_weights."""
    B, S, D = x.shape
    H_pad = w2t.shape[0]
    assert w2t.shape == (H_pad, D)
    assert w13t.shape == (D, 2 * H_pad)
    assert H_pad % tn == 0

    M = B * S
    out_itemsize = jnp.dtype(x.dtype).itemsize
    if tm is None:
        tm = _pick_tm(M, D, tn, out_itemsize)
    else:
        tm = min(max(8, _round_up(tm, 8)), _round_up(M, 8))
    M_pad = _round_up(M, tm)

    x2d = x.reshape(M, D).astype(jnp.bfloat16)
    if M_pad != M:
        x2d = jnp.pad(x2d, ((0, M_pad - M), (0, 0)))

    grid = (M_pad // tm, H_pad // tn)      # rows parallel; hidden = reduction, last

    # Raise the scoped VMEM limit only when the working set actually needs it,
    # capped at 64 MiB so it stays valid on every chip generation.
    if vmem_limit_bytes is None:
        need = _working_set_bytes(tm, tn, D, out_itemsize)
        if need > _DEFAULT_SCOPED_VMEM:
            vmem_limit_bytes = min(int(need * 1.15), 64 * 2**20)

    cost = pl.CostEstimate(
        flops=2 * M_pad * D * (2 * H_pad) + 2 * M_pad * H_pad * D,
        transcendentals=M_pad * H_pad,
        bytes_accessed=(x2d.size * x2d.dtype.itemsize
                        + w13t.size * w13t.dtype.itemsize
                        + w2t.size * w2t.dtype.itemsize
                        + M_pad * D * out_itemsize),
    )

    out2d = pl.pallas_call(
        functools.partial(_ffn_kernel, tn=tn),
        out_shape=jax.ShapeDtypeStruct((M_pad, D), x.dtype),
        grid_spec=pltpu.PrefetchScalarGridSpec(
            num_scalar_prefetch=0,
            grid=grid,
            in_specs=[
                pl.BlockSpec((tm, D), lambda i, h: (i, 0)),        # x rows (reused over h)
                pl.BlockSpec((D, 2 * tn), lambda i, h: (0, h)),    # fused w1/w3 tile (streams)
                pl.BlockSpec((tn, D), lambda i, h: (h, 0)),        # w2 tile (streams)
            ],
            out_specs=pl.BlockSpec((tm, D), lambda i, h: (i, 0)),
            scratch_shapes=[pltpu.VMEM((tm, D), jnp.float32)],     # f32 accumulator
        ),
        compiler_params=pltpu.CompilerParams(
            dimension_semantics=("parallel", "arbitrary"),
            vmem_limit_bytes=vmem_limit_bytes,
        ),
        cost_estimate=cost,
    )(x2d, w13t, w2t)

    return out2d[:M].reshape(B, S, D)


def make_params(key, dim, hidden_dim, multiple_of, ffn_dim_multiplier=None):
    # reproduce the hidden-dim arithmetic from FeedForward.__init__
    hidden_dim = int(2 * hidden_dim / 3)
    if ffn_dim_multiplier is not None:
        hidden_dim = int(ffn_dim_multiplier * hidden_dim)
    hidden_dim = multiple_of * ((hidden_dim + multiple_of - 1) // multiple_of)

    k1, k2, k3 = jax.random.split(key, 3)
    # Deterministic synthetic weights (fan-in scaling), PyTorch (out, in) layout.
    w1 = jax.random.normal(k1, (hidden_dim, dim), jnp.float32) / math.sqrt(dim)
    w2 = jax.random.normal(k2, (dim, hidden_dim), jnp.float32) / math.sqrt(hidden_dim)
    w3 = jax.random.normal(k3, (hidden_dim, dim), jnp.float32) / math.sqrt(dim)
    return w1, w2, w3, hidden_dim


if __name__ == "__main__":
    batch, seq, dim = 2, 8, 256
    key = jax.random.PRNGKey(0)
    kx, kw = jax.random.split(key)

    # llama convention: hidden_dim arg = 4*dim before the 2/3 + rounding logic
    w1, w2, w3, hidden_dim = make_params(kw, dim, 4 * dim, multiple_of=256,
                                         ffn_dim_multiplier=None)
    x = jax.random.normal(kx, (batch, seq, dim), jnp.float32)

    # One-time weight prep (transpose + pad + fuse + bf16 cast) outside the hot path.
    w13t, w2t, tn = prepare_ffn_weights(w1, w2, w3)

    out = feed_forward(x, w13t, w2t, tn)
    out = jax.block_until_ready(out)
    assert out.shape == (batch, seq, dim)

    # Reference with matching precision: bf16 MXU inputs, f32 accumulation,
    # f32 SwiGLU epilogue, bf16 cast at the w2 boundary.
    x2d = x.reshape(-1, dim).astype(jnp.bfloat16)
    w1b, w2b, w3b = (w.astype(jnp.bfloat16) for w in (w1, w2, w3))
    a = jnp.dot(x2d, w1b.T, preferred_element_type=jnp.float32)
    b = jnp.dot(x2d, w3b.T, preferred_element_type=jnp.float32)
    h = (a * jax.nn.sigmoid(a)) * b
    ref = jnp.dot(h.astype(jnp.bfloat16), w2b.T,
                  preferred_element_type=jnp.float32).reshape(batch, seq, dim)

    assert jnp.allclose(out, ref.astype(out.dtype), atol=5e-3, rtol=5e-3), \
        "mismatch vs reference"

    # TODO(synk): Column/RowParallelLinear tensor-parallel sharding (multi-device
    # all-reduce of w2 output) is not modeled; this is the single-device forward.
    print("KERNEL_OK")
</pallas_src>

<mosaic_0001>
module attributes {stable_mosaic.version = 11 : i64} {
  func.func @_ffn_kernel(%arg0: i32, %arg1: i32, %arg2: memref<16x256xbf16, #tpu.memory_space<vmem>>, %arg3: memref<256x1024xbf16, #tpu.memory_space<vmem>>, %arg4: memref<512x256xbf16, #tpu.memory_space<vmem>>, %arg5: memref<16x256xf32, #tpu.memory_space<vmem>>, %arg6: memref<16x256xf32, #tpu.memory_space<vmem>>) attributes {dimension_semantics = [#tpu.dimension_semantics<parallel>, #tpu.dimension_semantics<arbitrary>], iteration_bounds = array<i64: 1, 2>, scalar_prefetch = 0 : i64, scratch_operands = 1 : i64, tpu.core_type = #tpu.core_type<tc>, window_params = [{transform_indices = @transform_0, window_bounds = array<i64: 16, 256>}, {transform_indices = @transform_1, window_bounds = array<i64: 256, 1024>}, {transform_indices = @transform_2, window_bounds = array<i64: 512, 256>}, {transform_indices = @transform_3, window_bounds = array<i64: 16, 256>}]} {
    %c0_i32 = arith.constant 0 : i32
    %0 = arith.cmpi eq, %arg1, %c0_i32 : i32
    %1 = arith.extui %0 : i1 to i32
    %c0_i32_0 = arith.constant 0 : i32
    %2 = arith.cmpi ne, %1, %c0_i32_0 : i32
    scf.if %2 {
      %cst_13 = arith.constant 0.000000e+00 : f32
      %24 = vector.broadcast %cst_13 : f32 to vector<16x256xf32>
      %c0_14 = arith.constant 0 : index
      %c0_15 = arith.constant 0 : index
      %25 = vector.load %arg6[%c0_14, %c0_15] : memref<16x256xf32, #tpu.memory_space<vmem>>, vector<16x256xf32>
      tpu.vector_store %arg6[%c0_14, %c0_15], %24 {strides = array<i32>} : memref<16x256xf32, #tpu.memory_space<vmem>>, vector<16x256xf32>,
    } else {
    }
    %c0 = arith.constant 0 : index
    %c0_1 = arith.constant 0 : index
    %3 = vector.load %arg2[%c0, %c0_1] : memref<16x256xbf16, #tpu.memory_space<vmem>>, vector<16x256xbf16>
    %c0_2 = arith.constant 0 : index
    %c0_3 = arith.constant 0 : index
    %4 = vector.load %arg3[%c0_2, %c0_3] : memref<256x1024xbf16, #tpu.memory_space<vmem>>, vector<256x1024xbf16>
    %cst = arith.constant dense<0.000000e+00> : vector<16x1024xf32>
    %5 = tpu.matmul %3, %4, %cst {dimension_numbers = #tpu.dot_dimension_numbers<[1], [0], [0], [1], [0, 0, 1, 1], [], []>} : vector<16x256xbf16>, vector<256x1024xbf16>, vector<16x1024xf32> -> vector<16x1024xf32>
    %6 = vector.extract_strided_slice %5 {offsets = [0, 0], sizes = [16, 512], strides = [1, 1]} : vector<16x1024xf32> to vector<16x512xf32>
    %7 = vector.extract_strided_slice %5 {offsets = [0, 512], sizes = [16, 512], strides = [1, 1]} : vector<16x1024xf32> to vector<16x512xf32>
    %8 = arith.negf %6 : vector<16x512xf32>
    %9 = math.exp %8 : vector<16x512xf32>
    %cst_4 = arith.constant 1.000000e+00 : f32
    %10 = vector.broadcast %cst_4 : f32 to vector<16x512xf32>
    %11 = arith.addf %10, %9 : vector<16x512xf32>
    %12 = arith.divf %10, %11 : vector<16x512xf32>
    %13 = arith.mulf %6, %12 : vector<16x512xf32>
    %14 = arith.mulf %13, %7 : vector<16x512xf32>
    %c0_5 = arith.constant 0 : index
    %c0_6 = arith.constant 0 : index
    %15 = vector.load %arg6[%c0_5, %c0_6] : memref<16x256xf32, #tpu.memory_space<vmem>>, vector<16x256xf32>
    %16 = arith.truncf %14 : vector<16x512xf32> to vector<16x512xbf16>
    %c0_7 = arith.constant 0 : index
    %c0_8 = arith.constant 0 : index
    %17 = vector.load %arg4[%c0_7, %c0_8] : memref<512x256xbf16, #tpu.memory_space<vmem>>, vector<512x256xbf16>
    %cst_9 = arith.constant dense<0.000000e+00> : vector<16x256xf32>
    %18 = tpu.matmul %16, %17, %cst_9 {dimension_numbers = #tpu.dot_dimension_numbers<[1], [0], [0], [1], [0, 0, 1, 1], [], []>} : vector<16x512xbf16>, vector<512x256xbf16>, vector<16x256xf32> -> vector<16x256xf32>
    %19 = arith.addf %15, %18 : vector<16x256xf32>
    %c0_10 = arith.constant 0 : index
    %c0_11 = arith.constant 0 : index
    %20 = vector.load %arg6[%c0_10, %c0_11] : memref<16x256xf32, #tpu.memory_space<vmem>>, vector<16x256xf32>
    tpu.vector_store %arg6[%c0_10, %c0_11], %19 {strides = array<i32>} : memref<16x256xf32, #tpu.memory_space<vmem>>, vector<16x256xf32>,
    %c1_i32 = arith.constant 1 : i32
    %21 = arith.cmpi eq, %arg1, %c1_i32 : i32
    %22 = arith.extui %21 : i1 to i32
    %c0_i32_12 = arith.constant 0 : i32
    %23 = arith.cmpi ne, %22, %c0_i32_12 : i32
    scf.if %23 {
      %c0_13 = arith.constant 0 : index
      %c0_14 = arith.constant 0 : index
      %24 = vector.load %arg6[%c0_13, %c0_14] : memref<16x256xf32, #tpu.memory_space<vmem>>, vector<16x256xf32>
      %c0_15 = arith.constant 0 : index
      %c0_16 = arith.constant 0 : index
      %25 = vector.load %arg5[%c0_15, %c0_16] : memref<16x256xf32, #tpu.memory_space<vmem>>, vector<16x256xf32>
      tpu.vector_store %arg5[%c0_15, %c0_16], %24 {strides = array<i32>} : memref<16x256xf32, #tpu.memory_space<vmem>>, vector<16x256xf32>,
    } else {
    }
    return
  }
  func.func @transform_0(%arg0: i32, %arg1: i32) -> (i32, i32) {
    %c0_i32 = arith.constant 0 : i32
    %c0_i32_0 = arith.constant 0 : i32
    return %arg0, %c0_i32 : i32, i32
  }
  func.func @transform_1(%arg0: i32, %arg1: i32) -> (i32, i32) {
    %c0_i32 = arith.constant 0 : i32
    %c0_i32_0 = arith.constant 0 : i32
    return %c0_i32, %arg1 : i32, i32
  }
  func.func @transform_2(%arg0: i32, %arg1: i32) -> (i32, i32) {
    %c0_i32 = arith.constant 0 : i32
    %c0_i32_0 = arith.constant 0 : i32
    return %arg1, %c0_i32 : i32, i32
  }
  func.func @transform_3(%arg0: i32, %arg1: i32) -> (i32, i32) {
    %c0_i32 = arith.constant 0 : i32
    %c0_i32_0 = arith.constant 0 : i32
    return %arg0, %c0_i32 : i32, i32
  }
}

</mosaic_0001>

<llo_original>
// kernel: tpu_custom_call.1
$region0: #{tpu_custom_call.1}
  #allocation0 [shape = 'u32[]', space=smem, size = 0x4, offset = 0x4, fixed_abs, tag = 'smem constant byte address 0x4 - core index']
  #allocation1 [shape = 'u32[72,128]{1,0:T(1,128)}', space=vmem, size = 0x9000, scoped, tag = 'internal scratch']
  #allocation2 [shape = 'f32[16,256]{1,0:T(8,128)}', space=vmem, size = 0x4000, scoped, tag = 'scratch operand']
  %s0 = inlined_call_operand.hbm [shape: bf16[16,256], index: 0, kind: input, shape index: {}]
  %s1 = inlined_call_operand.hbm [shape: bf16[256,2048], index: 1, kind: input, shape index: {}]
  %s2 = inlined_call_operand.hbm [shape: bf16[1024,256], index: 2, kind: input, shape index: {}]
  %s3 = inlined_call_operand.hbm [shape: f32[16,256], index: 3, kind: output, shape index: {}]
  %s4 = sld [smem:[#allocation0]]
  $region65: #{tpu_custom_call.1} parent=0
    _
  %s6 = ssub.s32 1, %s4
  %s7 = scalar_select 0, %s6, %s4
  $region1: #{tpu_custom_call.1} parent=0
    #allocation3 [shape = 'u8[8192]{0}', space=vmem, size = 0x2000, scoped, tag = 'input window, operand 0, single buffered']
    #allocation4 [shape = 's32[2]{0}', space=sflag, size = 0x8, scoped, tag = 'scoped memory for tpu_custom_call.1']
    #allocation5 [shape = 's32[2]{0}', space=sflag, size = 0x8, scoped, tag = 'scoped memory for tpu_custom_call.1']
    #allocation6 [shape = 'u8[1048576]{0}', space=vmem, size = 0x100000, scoped, tag = 'input window, operand 1']
    #allocation7 [shape = 's32[2]{0}', space=sflag, size = 0x8, scoped, tag = 'scoped memory for tpu_custom_call.1']
    #allocation8 [shape = 'u8[524288]{0}', space=vmem, size = 0x80000, scoped, tag = 'input window, operand 2']
    #allocation9 [shape = 'u8[16384]{0}', space=vmem, size = 0x4000, scoped, tag = 'output window, operand 0, single buffered']
    %8 = vsyncpa [#allocation4], 0
    %9 = vsyncpa [#allocation7], 0
    %s10 = scalar_lea.sflag [#allocation7], 1
    %11 = vsyncpa %s10, 0
    %12 = vsyncpa [#allocation5], 0
    loop: start=0, step=1, limit=4
    $region2: #{tpu_custom_call.1} parent=1 // loop_pre_header
      _
    $region3: #{tpu_custom_call.1} parent=1 // loop_header
      %s14 = sphi 0, %s18
      %p15 = scmp.ge.s32.totalorder %s14, 4
      %s21 = sphi 0, %s33
      %s22 = sphi 0, %s29
      %s23 = sphi 0, %s21
      %s24 = sphi 0, %s22
      %s25 = sphi 0, %s23
      %s26 = sphi 0, %s24
      %s36 = sphi 0, %s38
      %s39 = sphi 0, %s36
      %s40 = sphi 0, %s39
      %s56 = sphi 0, %s40
      %s62 = sphi 0, %s64
      %s65 = sphi 0, %s62
      %s66 = sphi 0, %s65
      %s82 = sphi 0, %s66
      %s88 = sphi 0, %s90
      %s91 = sphi 0, %s88
      %s92 = sphi 0, %s91
      %s108 = sphi 0, %s92
      %s114 = sphi 0, %s116
      %s117 = sphi 0, %s114
      %s118 = sphi 0, %s117
      %s134 = sphi 0, %s118
    $region4: #{tpu_custom_call.1} parent=1 // loop_header_branch
      %17 = sbr.rel (%p15) target = $region8
    $region5: #{tpu_custom_call.1} parent=1 // loop_body
      %s19 = ssub.s32 %s14, 1
      %s20 = ssub.s32 %s14, 2
      %s27 = sadd.s32 1, %s22
      %p28 = scmp.ge.s32.totalorder %s27, 2
      %s29 = scalar_select %p28, 0, %s27
      %s30 = sadd.s32 1, %s21
      %s31 = scalar_select %p28, %s30, %s21
      %p32 = scmp.ge.s32.totalorder %s31, 1
      %s33 = scalar_select %p32, 0, %s31
      %s34 = ssub.s32 %s21, %s33
      %p35 = scmp.eq.s32.totalorder %s34, 0
      %s37 = sadd.s32 %s36, 1
      %s38 = scalar_select %p35, %s36, %s37
      %p41 = pneg %p35
      %p42 = scmp.eq.s32.totalorder %s14, 1
      %p43 = por %p41, %p42
      %p44 = scmp.ne.s32.totalorder %s36, %s39
      %p45 = scmp.eq.s32.totalorder %s14, 0
      %p46 = por %p44, %p45
      %p47 = scmp.ne.s32.totalorder %s36, %s39
      %p48 = scmp.eq.s32.totalorder %s19, 1
      %p49 = por %p47, %p48
      %p50 = scmp.ne.s32.totalorder %s39, %s40
      %p51 = scmp.eq.s32.totalorder %s19, 0
      %p52 = por %p50, %p51
      %p53 = scmp.ne.s32.totalorder %s39, %s40
      %p54 = scmp.eq.s32.totalorder %s20, 1
      %p55 = por %p53, %p54
      %p57 = scmp.ne.s32.totalorder %s40, %s56
      %p58 = scmp.eq.s32.totalorder %s20, 0
      %p59 = por %p57, %p58
      %s60 = ssub.s32 %s22, %s29
      %p61 = scmp.eq.s32.totalorder %s60, 0
      %s63 = sadd.s32 %s62, 1
      %s64 = scalar_select %p61, %s62, %s63
      %p67 = pneg %p61
      %p68 = scmp.eq.s32.totalorder %s14, 1
      %p69 = por %p67, %p68
      %p70 = scmp.ne.s32.totalorder %s62, %s65
      %p71 = scmp.eq.s32.totalorder %s14, 0
      %p72 = por %p70, %p71
      %p73 = scmp.ne.s32.totalorder %s62, %s65
      %p74 = scmp.eq.s32.totalorder %s19, 1
      %p75 = por %p73, %p74
      %p76 = scmp.ne.s32.totalorder %s65, %s66
      %p77 = scmp.eq.s32.totalorder %s19, 0
      %p78 = por %p76, %p77
      %p79 = scmp.ne.s32.totalorder %s65, %s66
      %p80 = scmp.eq.s32.totalorder %s20, 1
      %p81 = por %p79, %p80
      %p83 = scmp.ne.s32.totalorder %s66, %s82
      %p84 = scmp.eq.s32.totalorder %s20, 0
      %p85 = por %p83, %p84
      %s86 = ssub.s32 %s22, %s29
      %p87 = scmp.eq.s32.totalorder %s86, 0
      %s89 = sadd.s32 %s88, 1
      %s90 = scalar_select %p87, %s88, %s89
      %p93 = pneg %p87
      %p94 = scmp.eq.s32.totalorder %s14, 1
      %p95 = por %p93, %p94
      %p96 = scmp.ne.s32.totalorder %s88, %s91
      %p97 = scmp.eq.s32.totalorder %s14, 0
      %p98 = por %p96, %p97
      %p99 = scmp.ne.s32.totalorder %s88, %s91
      %p100 = scmp.eq.s32.totalorder %s19, 1
      %p101 = por %p99, %p100
      %p102 = scmp.ne.s32.totalorder %s91, %s92
      %p103 = scmp.eq.s32.totalorder %s19, 0
      %p104 = por %p102, %p103
      %p105 = scmp.ne.s32.totalorder %s91, %s92
      %p106 = scmp.eq.s32.totalorder %s20, 1
      %p107 = por %p105, %p106
      %p109 = scmp.ne.s32.totalorder %s92, %s108
      %p110 = scmp.eq.s32.totalorder %s20, 0
      %p111 = por %p109, %p110
      %s112 = ssub.s32 %s21, %s33
      %p113 = scmp.eq.s32.totalorder %s112, 0
      %s115 = sadd.s32 %s114, 1
      %s116 = scalar_select %p113, %s114, %s115
      %p119 = pneg %p113
      %p120 = scmp.eq.s32.totalorder %s14, 1
      %p121 = por %p119, %p120
      %p122 = scmp.ne.s32.totalorder %s114, %s117
      %p123 = scmp.eq.s32.totalorder %s14, 0
      %p124 = por %p122, %p123
      %p125 = scmp.ne.s32.totalorder %s114, %s117
      %p126 = scmp.eq.s32.totalorder %s19, 1
      %p127 = por %p125, %p126
      %p128 = scmp.ne.s32.totalorder %s117, %s118
      %p129 = scmp.eq.s32.totalorder %s19, 0
      %p130 = por %p128, %p129
      %p131 = scmp.ne.s32.totalorder %s117, %s118
      %p132 = scmp.eq.s32.totalorder %s20, 1
      %p133 = por %p131, %p132
      %p135 = scmp.ne.s32.totalorder %s118, %s134
      %p136 = scmp.eq.s32.totalorder %s20, 0
      %p137 = por %p135, %p136
      %p138 = scmp.le.s32.totalorder 1, %s14
      %p139 = scmp.lt.s32.totalorder %s14, 3
      %p140 = pnand %p138, %p139
      %p141 = pneg %p140
      // Predicated region
      $region9: #{tpu_custom_call.1} parent=5 // pred_check
        _
      $region10: #{tpu_custom_call.1} parent=5 // pred_check_branch
        %143 = sbr.rel (%p140) target = $region12
      $region11: #{tpu_custom_call.1} parent=5 // pred_region
        %s144 = ssub.s32 %s14, 1
        // Predicated region
        $region13: #{tpu_custom_call.1} parent=11 // pred_check
          %p145 = pneg %p52
        $region14: #{tpu_custom_call.1} parent=11 // pred_check_branch
          %147 = sbr.rel (%p145) target = $region16
        $region15: #{tpu_custom_call.1} parent=11 // pred_region
          %s148 = smul.u32 2, %s23
          %150 = vsyncadd [#allocation4], 0
          %s151 = smul.addr %s148, 2
          %s152 = smul.addr %s151, 4
          %s153 = scalar_lea.hbm %s0, %s152
          %s154 = sshll.u32 %s153, 4
          %s155 = int_to_ptr.hbm [resolvable:$true] %s154
          %s156 = sshll.u32 [#allocation3], 4
          %s157 = int_to_ptr.vmem [resolvable:$true] %s156
          %162 = dma.hbm_to_vmem [thread:$0]  %s155, 256, %s157, [#allocation4], 128, 128, 8
        $region16: #{tpu_custom_call.1} parent=11 // pred_fallthru
          _
      $region12: #{tpu_custom_call.1} parent=5 // pred_fallthru
        _
      %p163 = scmp.lt.s32.totalorder %s14, 2
      // Predicated region
      $region17: #{tpu_custom_call.1} parent=5 // pred_check
        %p164 = pneg %p163
      $region18: #{tpu_custom_call.1} parent=5 // pred_check_branch
        %166 = sbr.rel (%p164) target = $region20
      $region19: #{tpu_custom_call.1} parent=5 // pred_region
        // Predicated region
        $region21: #{tpu_custom_call.1} parent=19 // pred_check
          %p167 = pneg %p72
        $region22: #{tpu_custom_call.1} parent=19 // pred_check_branch
          %169 = sbr.rel (%p167) target = $region24
        $region23: #{tpu_custom_call.1} parent=19 // pred_region
          %s170 = sand.u32 %s14, 1
          %s171 = scalar_lea.sflag [#allocation7], %s170
          %s172 = sand.u32 %s62, 1
          %s173 = smul.addr %s172, 1024
          %s174 = scalar_lea.vmem [#allocation6], %s173
          %s175 = smul.u32 8, %s22
          %177 = vsyncadd %s171, 0
          %s178 = smul.addr %s175, 4
          %s179 = scalar_lea.hbm %s1, %s178
          %s180 = sshll.u32 %s179, 4
          %s181 = int_to_ptr.hbm [resolvable:$true] %s180
          %s182 = sshll.u32 %s174, 4
          %s183 = int_to_ptr.vmem [resolvable:$true] %s182
          %188 = dma.hbm_to_vmem [thread:$0]  %s181, 16384, %s183, %s171, 1024, 512, 32
        $region24: #{tpu_custom_call.1} parent=19 // pred_fallthru
          _
        // Predicated region
        $region25: #{tpu_custom_call.1} parent=19 // pred_check
          %p189 = pneg %p98
        $region26: #{tpu_custom_call.1} parent=19 // pred_check_branch
          %191 = sbr.rel (%p189) target = $region28
        $region27: #{tpu_custom_call.1} parent=19 // pred_region
          %s192 = sand.u32 %s14, 1
          %s193 = scalar_lea.sflag [#allocation7], %s192
          %s194 = sand.u32 %s88, 1
          %s195 = smul.addr %s194, 512
          %s196 = scalar_lea.vmem [#allocation8], %s195
          %s197 = smul.u32 64, %s22
          %199 = vsyncadd %s193, 0
          %s200 = smul.addr %s197, 2
          %s201 = smul.addr %s200, 4
          %s202 = scalar_lea.hbm %s2, %s201
          %s203 = sshll.u32 %s202, 4
          %s204 = int_to_ptr.hbm [resolvable:$true] %s203
          %s205 = sshll.u32 %s196, 4
          %s206 = int_to_ptr.vmem [resolvable:$true] %s205
          %211 = dma.hbm_to_vmem [thread:$0]  %s204, 8192, %s206, %s193, 128, 128, 8
        $region28: #{tpu_custom_call.1} parent=19 // pred_fallthru
          _
      $region20: #{tpu_custom_call.1} parent=5 // pred_fallthru
        _
      %p212 = scmp.le.s32.totalorder 1, %s14
      %p213 = scmp.lt.s32.totalorder %s14, 3
      %p214 = pnand %p212, %p213
      %p215 = pneg %p214
      // Predicated region
      $region29: #{tpu_custom_call.1} parent=5 // pred_check
        _
      $region30: #{tpu_custom_call.1} parent=5 // pred_check_branch
        %217 = sbr.rel (%p214) target = $region32
      $region31: #{tpu_custom_call.1} parent=5 // pred_region
        %s218 = ssub.s32 %s14, 1
        // Predicated region
        $region33: #{tpu_custom_call.1} parent=31 // pred_check
          %p219 = pneg %p52
        $region34: #{tpu_custom_call.1} parent=31 // pred_check_branch
          %221 = sbr.rel (%p219) target = $region36
        $region35: #{tpu_custom_call.1} parent=31 // pred_region
          %223 = dma.done [#allocation4], 256
        $region36: #{tpu_custom_call.1} parent=31 // pred_fallthru
          _
        %s224 = sand.u32 %s19, 1
        %s225 = scalar_lea.sflag [#allocation7], %s224
        %s226 = sand.u32 %s65, 1
        %s227 = smul.addr %s226, 1024
        %s228 = scalar_lea.vmem [#allocation6], %s227
        // Predicated region
        $region37: #{tpu_custom_call.1} parent=31 // pred_check
          %p229 = pneg %p78
        $region38: #{tpu_custom_call.1} parent=31 // pred_check_branch
          %231 = sbr.rel (%p229) target = $region40
        $region39: #{tpu_custom_call.1} parent=31 // pred_region
          %233 = dma.done %s225, 16384
        $region40: #{tpu_custom_call.1} parent=31 // pred_fallthru
          _
        %s234 = sand.u32 %s19, 1
        %s235 = scalar_lea.sflag [#allocation7], %s234
        %s236 = sand.u32 %s91, 1
        %s237 = smul.addr %s236, 512
        %s238 = scalar_lea.vmem [#allocation8], %s237
        // Predicated region
        $region41: #{tpu_custom_call.1} parent=31 // pred_check
          %p239 = pneg %p104
        $region42: #{tpu_custom_call.1} parent=31 // pred_check_branch
          %241 = sbr.rel (%p239) target = $region44
        $region43: #{tpu_custom_call.1} parent=31 // pred_region
          %243 = dma.done %s235, 8192
        $region44: #{tpu_custom_call.1} parent=31 // pred_fallthru
          _
        %p244 = pneg %p52
        %p245 = pneg %p49
        %s246 = sand.u32 %s19, 1
        %s247 = scalar_lea.sflag [#allocation7], %s246
        %s248 = sand.u32 %s65, 1
        %s249 = smul.addr %s248, 1024
        %s250 = scalar_lea.vmem [#allocation6], %s249
        %p251 = pneg %p78
        %p252 = pneg %p75
        %s253 = sand.u32 %s19, 1
        %s254 = scalar_lea.sflag [#allocation7], %s253
        %s255 = sand.u32 %s91, 1
        %s256 = smul.addr %s255, 512
        %s257 = scalar_lea.vmem [#allocation8], %s256
        %p258 = pneg %p104
        %p259 = pneg %p101
        %p260 = pneg %p130
        %p261 = pneg %p127
        %s262 = smul.u32 2, %s23
        %s263 = smul.u32 8, %s24
        %s264 = smul.u32 64, %s24
        %s265 = smul.u32 2, %s23
        %p266 = scmp.eq.s32.totalorder %s24, 0
        // Predicated region
        $region45: #{tpu_custom_call.1} parent=31 // pred_check
          %p267 = pneg %p266
        $region46: #{tpu_custom_call.1} parent=31 // pred_check_branch
          %269 = sbr.rel (%p267) target = $region48
        $region47: #{tpu_custom_call.1} parent=31 // pred_region
          %270 = vst [vmem:[#allocation2] sm:$0xff] 0.0
          %271 = vst [vmem:[#allocation2 + $0x8] sm:$0xff] 0.0
          %272 = vst [vmem:[#allocation2 + $0x10] sm:$0xff] 0.0
          %273 = vst [vmem:[#allocation2 + $0x18] sm:$0xff] 0.0
        $region48: #{tpu_custom_call.1} parent=31 // pred_fallthru
          _
        %v274 = vld [vmem:[#allocation3] sm:$0xff]
        %v275 = vld [vmem:[#allocation3 + $0x8] sm:$0xff]
        %v276 = vld [vmem:[%s228] sm:$0xff]
        %v277 = vld [vmem:[%s228 + $0x8] sm:$0xff]
        %v278 = vld [vmem:[%s228 + $0x10] sm:$0xff]
        %v279 = vld [vmem:[%s228 + $0x18] sm:$0xff]
        %v280 = vld [vmem:[%s228 + $0x20] sm:$0xff]
        %v281 = vld [vmem:[%s228 + $0x28] sm:$0xff]
        %v282 = vld [vmem:[%s228 + $0x30] sm:$0xff]
        %v283 = vld [vmem:[%s228 + $0x38] sm:$0xff]
        %v284 = vld [vmem:[%s228 + $0x40] sm:$0xff]
        %v285 = vld [vmem:[%s228 + $0x48] sm:$0xff]
        %v286 = vld [vmem:[%s228 + $0x50] sm:$0xff]
        %v287 = vld [vmem:[%s228 + $0x58] sm:$0xff]
        %v288 = vld [vmem:[%s228 + $0x60] sm:$0xff]
        %v289 = vld [vmem:[%s228 + $0x68] sm:$0xff]
        %v290 = vld [vmem:[%s228 + $0x70] sm:$0xff]
        %v291 = vld [vmem:[%s228 + $0x78] sm:$0xff]
        %v292 = vld [vmem:[%s228 + $0x80] sm:$0xff]
        %v293 = vld [vmem:[%s228 + $0x88] sm:$0xff]
        %v294 = vld [vmem:[%s228 + $0x90] sm:$0xff]
        %v295 = vld [vmem:[%s228 + $0x98] sm:$0xff]
        %v296 = vld [vmem:[%s228 + $0xa0] sm:$0xff]
        %v297 = vld [vmem:[%s228 + $0xa8] sm:$0xff]
        %v298 = vld [vmem:[%s228 + $0xb0] sm:$0xff]
        %v299 = vld [vmem:[%s228 + $0xb8] sm:$0xff]
        %v300 = vld [vmem:[%s228 + $0xc0] sm:$0xff]
        %v301 = vld [vmem:[%s228 + $0xc8] sm:$0xff]
        %v302 = vld [vmem:[%s228 + $0xd0] sm:$0xff]
        %v303 = vld [vmem:[%s228 + $0xd8] sm:$0xff]
        %v304 = vld [vmem:[%s228 + $0xe0] sm:$0xff]
        %v305 = vld [vmem:[%s228 + $0xe8] sm:$0xff]
        %v306 = vld [vmem:[%s228 + $0xf0] sm:$0xff]
        %v307 = vld [vmem:[%s228 + $0xf8] sm:$0xff]
        %v308 = vld [vmem:[%s228 + $0x100] sm:$0xff]
        %v309 = vld [vmem:[%s228 + $0x108] sm:$0xff]
        %v310 = vld [vmem:[%s228 + $0x110] sm:$0xff]
        %v311 = vld [vmem:[%s228 + $0x118] sm:$0xff]
        %v312 = vld [vmem:[%s228 + $0x120] sm:$0xff]
        %v313 = vld [vmem:[%s228 + $0x128] sm:$0xff]
        %v314 = vld [vmem:[%s228 + $0x130] sm:$0xff]
        %v315 = vld [vmem:[%s228 + $0x138] sm:$0xff]
        %v316 = vld [vmem:[%s228 + $0x140] sm:$0xff]
        %v317 = vld [vmem:[%s228 + $0x148] sm:$0xff]
        %v318 = vld [vmem:[%s228 + $0x150] sm:$0xff]
        %v319 = vld [vmem:[%s228 + $0x158] sm:$0xff]
        %v320 = vld [vmem:[%s228 + $0x160] sm:$0xff]
        %v321 = vld [vmem:[%s228 + $0x168] sm:$0xff]
        %v322 = vld [vmem:[%s228 + $0x170] sm:$0xff]
        %v323 = vld [vmem:[%s228 + $0x178] sm:$0xff]
        %v324 = vld [vmem:[%s228 + $0x180] sm:$0xff]
        %v325 = vld [vmem:[%s228 + $0x188] sm:$0xff]
        %v326 = vld [vmem:[%s228 + $0x190] sm:$0xff]
        %v327 = vld [vmem:[%s228 + $0x198] sm:$0xff]
        %v328 = vld [vmem:[%s228 + $0x1a0] sm:$0xff]
        %v329 = vld [vmem:[%s228 + $0x1a8] sm:$0xff]
        %v330 = vld [vmem:[%s228 + $0x1b0] sm:$0xff]
        %v331 = vld [vmem:[%s228 + $0x1b8] sm:$0xff]
        %v332 = vld [vmem:[%s228 + $0x1c0] sm:$0xff]
        %v333 = vld [vmem:[%s228 + $0x1c8] sm:$0xff]
        %v334 = vld [vmem:[%s228 + $0x1d0] sm:$0xff]
        %v335 = vld [vmem:[%s228 + $0x1d8] sm:$0xff]
        %v336 = vld [vmem:[%s228 + $0x1e0] sm:$0xff]
        %v337 = vld [vmem:[%s228 + $0x1e8] sm:$0xff]
        %v338 = vld [vmem:[%s228 + $0x1f0] sm:$0xff]
        %v339 = vld [vmem:[%s228 + $0x1f8] sm:$0xff]
        %v340 = vld [vmem:[%s228 + $0x200] sm:$0xff]
        %v341 = vld [vmem:[%s228 + $0x208] sm:$0xff]
        %v342 = vld [vmem:[%s228 + $0x210] sm:$0xff]
        %v343 = vld [vmem:[%s228 + $0x218] sm:$0xff]
        %v344 = vld [vmem:[%s228 + $0x220] sm:$0xff]
        %v345 = vld [vmem:[%s228 + $0x228] sm:$0xff]
        %v346 = vld [vmem:[%s228 + $0x230] sm:$0xff]
        %v347 = vld [vmem:[%s228 + $0x238] sm:$0xff]
        %v348 = vld [vmem:[%s228 + $0x240] sm:$0xff]
        %v349 = vld [vmem:[%s228 + $0x248] sm:$0xff]
        %v350 = vld [vmem:[%s228 + $0x250] sm:$0xff]
        %v351 = vld [vmem:[%s228 + $0x258] sm:$0xff]
        %v352 = vld [vmem:[%s228 + $0x260] sm:$0xff]
        %v353 = vld [vmem:[%s228 + $0x268] sm:$0xff]
        %v354 = vld [vmem:[%s228 + $0x270] sm:$0xff]
        %v355 = vld [vmem:[%s228 + $0x278] sm:$0xff]
        %v356 = vld [vmem:[%s228 + $0x280] sm:$0xff]
        %v357 = vld [vmem:[%s228 + $0x288] sm:$0xff]
        %v358 = vld [vmem:[%s228 + $0x290] sm:$0xff]
        %v359 = vld [vmem:[%s228 + $0x298] sm:$0xff]
        %v360 = vld [vmem:[%s228 + $0x2a0] sm:$0xff]
        %v361 = vld [vmem:[%s228 + $0x2a8] sm:$0xff]
        %v362 = vld [vmem:[%s228 + $0x2b0] sm:$0xff]
        %v363 = vld [vmem:[%s228 + $0x2b8] sm:$0xff]
        %v364 = vld [vmem:[%s228 + $0x2c0] sm:$0xff]
        %v365 = vld [vmem:[%s228 + $0x2c8] sm:$0xff]
        %v366 = vld [vmem:[%s228 + $0x2d0] sm:$0xff]
        %v367 = vld [vmem:[%s228 + $0x2d8] sm:$0xff]
        %v368 = vld [vmem:[%s228 + $0x2e0] sm:$0xff]
        %v369 = vld [vmem:[%s228 + $0x2e8] sm:$0xff]
        %v370 = vld [vmem:[%s228 + $0x2f0] sm:$0xff]
        %v371 = vld [vmem:[%s228 + $0x2f8] sm:$0xff]
        %v372 = vld [vmem:[%s228 + $0x300] sm:$0xff]
        %v373 = vld [vmem:[%s228 + $0x308] sm:$0xff]
        %v374 = vld [vmem:[%s228 + $0x310] sm:$0xff]
        %v375 = vld [vmem:[%s228 + $0x318] sm:$0xff]
        %v376 = vld [vmem:[%s228 + $0x320] sm:$0xff]
        %v377 = vld [vmem:[%s228 + $0x328] sm:$0xff]
        %v378 = vld [vmem:[%s228 + $0x330] sm:$0xff]
        %v379 = vld [vmem:[%s228 + $0x338] sm:$0xff]
        %v380 = vld [vmem:[%s228 + $0x340] sm:$0xff]
        %v381 = vld [vmem:[%s228 + $0x348] sm:$0xff]
        %v382 = vld [vmem:[%s228 + $0x350] sm:$0xff]
        %v383 = vld [vmem:[%s228 + $0x358] sm:$0xff]
        %v384 = vld [vmem:[%s228 + $0x360] sm:$0xff]
        %v385 = vld [vmem:[%s228 + $0x368] sm:$0xff]
        %v386 = vld [vmem:[%s228 + $0x370] sm:$0xff]
        %v387 = vld [vmem:[%s228 + $0x378] sm:$0xff]
        %v388 = vld [vmem:[%s228 + $0x380] sm:$0xff]
        %v389 = vld [vmem:[%s228 + $0x388] sm:$0xff]
        %v390 = vld [vmem:[%s228 + $0x390] sm:$0xff]
        %v391 = vld [vmem:[%s228 + $0x398] sm:$0xff]
        %v392 = vld [vmem:[%s228 + $0x3a0] sm:$0xff]
        %v393 = vld [vmem:[%s228 + $0x3a8] sm:$0xff]
        %v394 = vld [vmem:[%s228 + $0x3b0] sm:$0xff]
        %v395 = vld [vmem:[%s228 + $0x3b8] sm:$0xff]
        %v396 = vld [vmem:[%s228 + $0x3c0] sm:$0xff]
        %v397 = vld [vmem:[%s228 + $0x3c8] sm:$0xff]
        %v398 = vld [vmem:[%s228 + $0x3d0] sm:$0xff]
        %v399 = vld [vmem:[%s228 + $0x3d8] sm:$0xff]
        %v400 = vld [vmem:[%s228 + $0x3e0] sm:$0xff]
        %v401 = vld [vmem:[%s228 + $0x3e8] sm:$0xff]
        %v402 = vld [vmem:[%s228 + $0x3f0] sm:$0xff]
        %v403 = vld [vmem:[%s228 + $0x3f8] sm:$0xff]
        %v406 = vunpack.c.l.b16 %v274
        %v407 = vunpack.c.h.b16 %v274
        %v408 = vunpack.c.l.b16 %v275
        %v409 = vunpack.c.h.b16 %v275
        %v410 = vpack.c.b16 %v408, %v406
        %v411 = vpack.c.b16 %v409, %v407
        %v542 = vunpack.c.l.b16 %v276
        %v543 = vunpack.c.h.b16 %v276
        %v544 = vunpack.c.l.b16 %v277
        %v545 = vunpack.c.h.b16 %v277
        %v546 = vunpack.c.l.b16 %v278
        %v547 = vunpack.c.h.b16 %v278
        %v548 = vunpack.c.l.b16 %v279
        %v549 = vunpack.c.h.b16 %v279
        %v550 = vunpack.c.l.b16 %v280
        %v551 = vunpack.c.h.b16 %v280
        %v552 = vunpack.c.l.b16 %v281
        %v553 = vunpack.c.h.b16 %v281
        %v554 = vunpack.c.l.b16 %v282
        %v555 = vunpack.c.h.b16 %v282
        %v556 = vunpack.c.l.b16 %v283
        %v557 = vunpack.c.h.b16 %v283
        %v558 = vunpack.c.l.b16 %v284
        %v559 = vunpack.c.h.b16 %v284
        %v560 = vunpack.c.l.b16 %v285
        %v561 = vunpack.c.h.b16 %v285
        %v562 = vunpack.c.l.b16 %v286
        %v563 = vunpack.c.h.b16 %v286
        %v564 = vunpack.c.l.b16 %v287
        %v565 = vunpack.c.h.b16 %v287
        %v566 = vunpack.c.l.b16 %v288
        %v567 = vunpack.c.h.b16 %v288
        %v568 = vunpack.c.l.b16 %v289
        %v569 = vunpack.c.h.b16 %v289
        %v570 = vunpack.c.l.b16 %v290
        %v571 = vunpack.c.h.b16 %v290
        %v572 = vunpack.c.l.b16 %v291
        %v573 = vunpack.c.h.b16 %v291
        %v574 = vunpack.c.l.b16 %v292
        %v575 = vunpack.c.h.b16 %v292
        %v576 = vunpack.c.l.b16 %v293
        %v577 = vunpack.c.h.b16 %v293
        %v578 = vunpack.c.l.b16 %v294
        %v579 = vunpack.c.h.b16 %v294
        %v580 = vunpack.c.l.b16 %v295
        %v581 = vunpack.c.h.b16 %v295
        %v582 = vunpack.c.l.b16 %v296
        %v583 = vunpack.c.h.b16 %v296
        %v584 = vunpack.c.l.b16 %v297
        %v585 = vunpack.c.h.b16 %v297
        %v586 = vunpack.c.l.b16 %v298
        %v587 = vunpack.c.h.b16 %v298
        %v588 = vunpack.c.l.b16 %v299
        %v589 = vunpack.c.h.b16 %v299
        %v590 = vunpack.c.l.b16 %v300
        %v591 = vunpack.c.h.b16 %v300
        %v592 = vunpack.c.l.b16 %v301
        %v593 = vunpack.c.h.b16 %v301
        %v594 = vunpack.c.l.b16 %v302
        %v595 = vunpack.c.h.b16 %v302
        %v596 = vunpack.c.l.b16 %v303
        %v597 = vunpack.c.h.b16 %v303
        %v598 = vunpack.c.l.b16 %v304
        %v599 = vunpack.c.h.b16 %v304
        %v600 = vunpack.c.l.b16 %v305
        %v601 = vunpack.c.h.b16 %v305
        %v602 = vunpack.c.l.b16 %v306
        %v603 = vunpack.c.h.b16 %v306
        %v604 = vunpack.c.l.b16 %v307
        %v605 = vunpack.c.h.b16 %v307
        %v606 = vunpack.c.l.b16 %v308
        %v607 = vunpack.c.h.b16 %v308
        %v608 = vunpack.c.l.b16 %v309
        %v609 = vunpack.c.h.b16 %v309
        %v610 = vunpack.c.l.b16 %v310
        %v611 = vunpack.c.h.b16 %v310
        %v612 = vunpack.c.l.b16 %v311
        %v613 = vunpack.c.h.b16 %v311
        %v614 = vunpack.c.l.b16 %v312
        %v615 = vunpack.c.h.b16 %v312
        %v616 = vunpack.c.l.b16 %v313
        %v617 = vunpack.c.h.b16 %v313
        %v618 = vunpack.c.l.b16 %v314
        %v619 = vunpack.c.h.b16 %v314
        %v620 = vunpack.c.l.b16 %v315
        %v621 = vunpack.c.h.b16 %v315
        %v622 = vunpack.c.l.b16 %v316
        %v623 = vunpack.c.h.b16 %v316
        %v624 = vunpack.c.l.b16 %v317
        %v625 = vunpack.c.h.b16 %v317
        %v626 = vunpack.c.l.b16 %v318
        %v627 = vunpack.c.h.b16 %v318
        %v628 = vunpack.c.l.b16 %v319
        %v629 = vunpack.c.h.b16 %v319
        %v630 = vunpack.c.l.b16 %v320
        %v631 = vunpack.c.h.b16 %v320
        %v632 = vunpack.c.l.b16 %v321
        %v633 = vunpack.c.h.b16 %v321
        %v634 = vunpack.c.l.b16 %v322
        %v635 = vunpack.c.h.b16 %v322
        %v636 = vunpack.c.l.b16 %v323
        %v637 = vunpack.c.h.b16 %v323
        %v638 = vunpack.c.l.b16 %v324
        %v639 = vunpack.c.h.b16 %v324
        %v640 = vunpack.c.l.b16 %v325
        %v641 = vunpack.c.h.b16 %v325
        %v642 = vunpack.c.l.b16 %v326
        %v643 = vunpack.c.h.b16 %v326
        %v644 = vunpack.c.l.b16 %v327
        %v645 = vunpack.c.h.b16 %v327
        %v646 = vunpack.c.l.b16 %v328
        %v647 = vunpack.c.h.b16 %v328
        %v648 = vunpack.c.l.b16 %v329
        %v649 = vunpack.c.h.b16 %v329
        %v650 = vunpack.c.l.b16 %v330
        %v651 = vunpack.c.h.b16 %v330
        %v652 = vunpack.c.l.b16 %v331
        %v653 = vunpack.c.h.b16 %v331
        %v654 = vunpack.c.l.b16 %v332
        %v655 = vunpack.c.h.b16 %v332
        %v656 = vunpack.c.l.b16 %v333
        %v657 = vunpack.c.h.b16 %v333
        %v658 = vunpack.c.l.b16 %v334
        %v659 = vunpack.c.h.b16 %v334
        %v660 = vunpack.c.l.b16 %v335
        %v661 = vunpack.c.h.b16 %v335
        %v662 = vunpack.c.l.b16 %v336
        %v663 = vunpack.c.h.b16 %v336
        %v664 = vunpack.c.l.b16 %v337
        %v665 = vunpack.c.h.b16 %v337
        %v666 = vunpack.c.l.b16 %v338
        %v667 = vunpack.c.h.b16 %v338
        %v668 = vunpack.c.l.b16 %v339
        %v669 = vunpack.c.h.b16 %v339
        %v670 = vunpack.c.l.b16 %v340
        %v671 = vunpack.c.h.b16 %v340
        %v672 = vunpack.c.l.b16 %v341
        %v673 = vunpack.c.h.b16 %v341
        %v674 = vunpack.c.l.b16 %v342
        %v675 = vunpack.c.h.b16 %v342
        %v676 = vunpack.c.l.b16 %v343
        %v677 = vunpack.c.h.b16 %v343
        %v678 = vunpack.c.l.b16 %v344
        %v679 = vunpack.c.h.b16 %v344
        %v680 = vunpack.c.l.b16 %v345
        %v681 = vunpack.c.h.b16 %v345
        %v682 = vunpack.c.l.b16 %v346
        %v683 = vunpack.c.h.b16 %v346
        %v684 = vunpack.c.l.b16 %v347
        %v685 = vunpack.c.h.b16 %v347
        %v686 = vunpack.c.l.b16 %v348
        %v687 = vunpack.c.h.b16 %v348
        %v688 = vunpack.c.l.b16 %v349
        %v689 = vunpack.c.h.b16 %v349
        %v690 = vunpack.c.l.b16 %v350
        %v691 = vunpack.c.h.b16 %v350
        %v692 = vunpack.c.l.b16 %v351
        %v693 = vunpack.c.h.b16 %v351
        %v694 = vunpack.c.l.b16 %v352
        %v695 = vunpack.c.h.b16 %v352
        %v696 = vunpack.c.l.b16 %v353
        %v697 = vunpack.c.h.b16 %v353
        %v698 = vunpack.c.l.b16 %v354
        %v699 = vunpack.c.h.b16 %v354
        %v700 = vunpack.c.l.b16 %v355
        %v701 = vunpack.c.h.b16 %v355
        %v702 = vunpack.c.l.b16 %v356
        %v703 = vunpack.c.h.b16 %v356
        %v704 = vunpack.c.l.b16 %v357
        %v705 = vunpack.c.h.b16 %v357
        %v706 = vunpack.c.l.b16 %v358
        %v707 = vunpack.c.h.b16 %v358
        %v708 = vunpack.c.l.b16 %v359
        %v709 = vunpack.c.h.b16 %v359
        %v710 = vunpack.c.l.b16 %v360
        %v711 = vunpack.c.h.b16 %v360
        %v712 = vunpack.c.l.b16 %v361
        %v713 = vunpack.c.h.b16 %v361
        %v714 = vunpack.c.l.b16 %v362
        %v715 = vunpack.c.h.b16 %v362
        %v716 = vunpack.c.l.b16 %v363
        %v717 = vunpack.c.h.b16 %v363
        %v718 = vunpack.c.l.b16 %v364
        %v719 = vunpack.c.h.b16 %v364
        %v720 = vunpack.c.l.b16 %v365
        %v721 = vunpack.c.h.b16 %v365
        %v722 = vunpack.c.l.b16 %v366
        %v723 = vunpack.c.h.b16 %v366
        %v724 = vunpack.c.l.b16 %v367
        %v725 = vunpack.c.h.b16 %v367
        %v726 = vunpack.c.l.b16 %v368
        %v727 = vunpack.c.h.b16 %v368
        %v728 = vunpack.c.l.b16 %v369
        %v729 = vunpack.c.h.b16 %v369
        %v730 = vunpack.c.l.b16 %v370
        %v731 = vunpack.c.h.b16 %v370
        %v732 = vunpack.c.l.b16 %v371
        %v733 = vunpack.c.h.b16 %v371
        %v734 = vunpack.c.l.b16 %v372
        %v735 = vunpack.c.h.b16 %v372
        %v736 = vunpack.c.l.b16 %v373
        %v737 = vunpack.c.h.b16 %v373
        %v738 = vunpack.c.l.b16 %v374
        %v739 = vunpack.c.h.b16 %v374
        %v740 = vunpack.c.l.b16 %v375
        %v741 = vunpack.c.h.b16 %v375
        %v742 = vunpack.c.l.b16 %v376
        %v743 = vunpack.c.h.b16 %v376
        %v744 = vunpack.c.l.b16 %v377
        %v745 = vunpack.c.h.b16 %v377
        %v746 = vunpack.c.l.b16 %v378
        %v747 = vunpack.c.h.b16 %v378
        %v748 = vunpack.c.l.b16 %v379
        %v749 = vunpack.c.h.b16 %v379
        %v750 = vunpack.c.l.b16 %v380
        %v751 = vunpack.c.h.b16 %v380
        %v752 = vunpack.c.l.b16 %v381
        %v753 = vunpack.c.h.b16 %v381
        %v754 = vunpack.c.l.b16 %v382
        %v755 = vunpack.c.h.b16 %v382
        %v756 = vunpack.c.l.b16 %v383
        %v757 = vunpack.c.h.b16 %v383
        %v758 = vunpack.c.l.b16 %v384
        %v759 = vunpack.c.h.b16 %v384
        %v760 = vunpack.c.l.b16 %v385
        %v761 = vunpack.c.h.b16 %v385
        %v762 = vunpack.c.l.b16 %v386
        %v763 = vunpack.c.h.b16 %v386
        %v764 = vunpack.c.l.b16 %v387
        %v765 = vunpack.c.h.b16 %v387
        %v766 = vunpack.c.l.b16 %v388
        %v767 = vunpack.c.h.b16 %v388
        %v768 = vunpack.c.l.b16 %v389
        %v769 = vunpack.c.h.b16 %v389
        %v770 = vunpack.c.l.b16 %v390
        %v771 = vunpack.c.h.b16 %v390
        %v772 = vunpack.c.l.b16 %v391
        %v773 = vunpack.c.h.b16 %v391
        %v774 = vunpack.c.l.b16 %v392
        %v775 = vunpack.c.h.b16 %v392
        %v776 = vunpack.c.l.b16 %v393
        %v777 = vunpack.c.h.b16 %v393
        %v778 = vunpack.c.l.b16 %v394
        %v779 = vunpack.c.h.b16 %v394
        %v780 = vunpack.c.l.b16 %v395
        %v781 = vunpack.c.h.b16 %v395
        %v782 = vunpack.c.l.b16 %v396
        %v783 = vunpack.c.h.b16 %v396
        %v784 = vunpack.c.l.b16 %v397
        %v785 = vunpack.c.h.b16 %v397
        %v786 = vunpack.c.l.b16 %v398
        %v787 = vunpack.c.h.b16 %v398
        %v788 = vunpack.c.l.b16 %v399
        %v789 = vunpack.c.h.b16 %v399
        %v790 = vunpack.c.l.b16 %v400
        %v791 = vunpack.c.h.b16 %v400
        %v792 = vunpack.c.l.b16 %v401
        %v793 = vunpack.c.h.b16 %v401
        %v794 = vunpack.c.l.b16 %v402
        %v795 = vunpack.c.h.b16 %v402
        %v796 = vunpack.c.l.b16 %v403
        %v797 = vunpack.c.h.b16 %v403
        %v798 = vpack.c.b16 %v550, %v542
        %v799 = vpack.c.b16 %v551, %v543
        %v800 = vpack.c.b16 %v552, %v544
        %v801 = vpack.c.b16 %v553, %v545
        %v802 = vpack.c.b16 %v554, %v546
        %v803 = vpack.c.b16 %v555, %v547
        %v804 = vpack.c.b16 %v556, %v548
        %v805 = vpack.c.b16 %v557, %v549
        %v806 = vpack.c.b16 %v566, %v558
        %v807 = vpack.c.b16 %v567, %v559
        %v808 = vpack.c.b16 %v568, %v560
        %v809 = vpack.c.b16 %v569, %v561
        %v810 = vpack.c.b16 %v570, %v562
        %v811 = vpack.c.b16 %v571, %v563
        %v812 = vpack.c.b16 %v572, %v564
        %v813 = vpack.c.b16 %v573, %v565
        %v814 = vpack.c.b16 %v582, %v574
        %v815 = vpack.c.b16 %v583, %v575
        %v816 = vpack.c.b16 %v584, %v576
        %v817 = vpack.c.b16 %v585, %v577
        %v818 = vpack.c.b16 %v586, %v578
        %v819 = vpack.c.b16 %v587, %v579
        %v820 = vpack.c.b16 %v588, %v580
        %v821 = vpack.c.b16 %v589, %v581
        %v822 = vpack.c.b16 %v598, %v590
        %v823 = vpack.c.b16 %v599, %v591
        %v824 = vpack.c.b16 %v600, %v592
        %v825 = vpack.c.b16 %v601, %v593
        %v826 = vpack.c.b16 %v602, %v594
        %v827 = vpack.c.b16 %v603, %v595
        %v828 = vpack.c.b16 %v604, %v596
        %v829 = vpack.c.b16 %v605, %v597
        %v830 = vpack.c.b16 %v614, %v606
        %v831 = vpack.c.b16 %v615, %v607
        %v832 = vpack.c.b16 %v616, %v608
        %v833 = vpack.c.b16 %v617, %v609
        %v834 = vpack.c.b16 %v618, %v610
        %v835 = vpack.c.b16 %v619, %v611
        %v836 = vpack.c.b16 %v620, %v612
        %v837 = vpack.c.b16 %v621, %v613
        %v838 = vpack.c.b16 %v630, %v622
        %v839 = vpack.c.b16 %v631, %v623
        %v840 = vpack.c.b16 %v632, %v624
        %v841 = vpack.c.b16 %v633, %v625
        %v842 = vpack.c.b16 %v634, %v626
        %v843 = vpack.c.b16 %v635, %v627
        %v844 = vpack.c.b16 %v636, %v628
        %v845 = vpack.c.b16 %v637, %v629
        %v846 = vpack.c.b16 %v646, %v638
        %v847 = vpack.c.b16 %v647, %v639
        %v848 = vpack.c.b16 %v648, %v640
        %v849 = vpack.c.b16 %v649, %v641
        %v850 = vpack.c.b16 %v650, %v642
        %v851 = vpack.c.b16 %v651, %v643
        %v852 = vpack.c.b16 %v652, %v644
        %v853 = vpack.c.b16 %v653, %v645
        %v854 = vpack.c.b16 %v662, %v654
        %v855 = vpack.c.b16 %v663, %v655
        %v856 = vpack.c.b16 %v664, %v656
        %v857 = vpack.c.b16 %v665, %v657
        %v858 = vpack.c.b16 %v666, %v658
        %v859 = vpack.c.b16 %v667, %v659
        %v860 = vpack.c.b16 %v668, %v660
        %v861 = vpack.c.b16 %v669, %v661
        %v862 = vpack.c.b16 %v678, %v670
        %v863 = vpack.c.b16 %v679, %v671
        %v864 = vpack.c.b16 %v680, %v672
        %v865 = vpack.c.b16 %v681, %v673
        %v866 = vpack.c.b16 %v682, %v674
        %v867 = vpack.c.b16 %v683, %v675
        %v868 = vpack.c.b16 %v684, %v676
        %v869 = vpack.c.b16 %v685, %v677
        %v870 = vpack.c.b16 %v694, %v686
        %v871 = vpack.c.b16 %v695, %v687
        %v872 = vpack.c.b16 %v696, %v688
        %v873 = vpack.c.b16 %v697, %v689
        %v874 = vpack.c.b16 %v698, %v690
        %v875 = vpack.c.b16 %v699, %v691
        %v876 = vpack.c.b16 %v700, %v692
        %v877 = vpack.c.b16 %v701, %v693
        %v878 = vpack.c.b16 %v710, %v702
        %v879 = vpack.c.b16 %v711, %v703
        %v880 = vpack.c.b16 %v712, %v704
        %v881 = vpack.c.b16 %v713, %v705
        %v882 = vpack.c.b16 %v714, %v706
        %v883 = vpack.c.b16 %v715, %v707
        %v884 = vpack.c.b16 %v716, %v708
        %v885 = vpack.c.b16 %v717, %v709
        %v886 = vpack.c.b16 %v726, %v718
        %v887 = vpack.c.b16 %v727, %v719
        %v888 = vpack.c.b16 %v728, %v720
        %v889 = vpack.c.b16 %v729, %v721
        %v890 = vpack.c.b16 %v730, %v722
        %v891 = vpack.c.b16 %v731, %v723
        %v892 = vpack.c.b16 %v732, %v724
        %v893 = vpack.c.b16 %v733, %v725
        %v894 = vpack.c.b16 %v742, %v734
        %v895 = vpack.c.b16 %v743, %v735
        %v896 = vpack.c.b16 %v744, %v736
        %v897 = vpack.c.b16 %v745, %v737
        %v898 = vpack.c.b16 %v746, %v738
        %v899 = vpack.c.b16 %v747, %v739
        %v900 = vpack.c.b16 %v748, %v740
        %v901 = vpack.c.b16 %v749, %v741
        %v902 = vpack.c.b16 %v758, %v750
        %v903 = vpack.c.b16 %v759, %v751
        %v904 = vpack.c.b16 %v760, %v752
        %v905 = vpack.c.b16 %v761, %v753
        %v906 = vpack.c.b16 %v762, %v754
        %v907 = vpack.c.b16 %v763, %v755
        %v908 = vpack.c.b16 %v764, %v756
        %v909 = vpack.c.b16 %v765, %v757
        %v910 = vpack.c.b16 %v774, %v766
        %v911 = vpack.c.b16 %v775, %v767
        %v912 = vpack.c.b16 %v776, %v768
        %v913 = vpack.c.b16 %v777, %v769
        %v914 = vpack.c.b16 %v778, %v770
        %v915 = vpack.c.b16 %v779, %v771
        %v916 = vpack.c.b16 %v780, %v772
        %v917 = vpack.c.b16 %v781, %v773
        %v918 = vpack.c.b16 %v790, %v782
        %v919 = vpack.c.b16 %v791, %v783
        %v920 = vpack.c.b16 %v792, %v784
        %v921 = vpack.c.b16 %v793, %v785
        %v922 = vpack.c.b16 %v794, %v786
        %v923 = vpack.c.b16 %v795, %v787
        %v924 = vpack.c.b16 %v796, %v788
        %v925 = vpack.c.b16 %v797, %v789
        %1054 = vmatpush.bf16.msra.mxu0 %v854
        %1055 = vmatpush.bf16.msra.mxu0 %v846
        %1056 = vmatpush.bf16.msra.mxu0 %v838
        %1057 = vmatpush.bf16.msra.mxu0 %v830
        %1058 = vmatpush.bf16.msra.mxu0 %v822
        %1059 = vmatpush.bf16.msra.mxu0 %v814
        %1060 = vmatpush.bf16.msra.mxu0 %v806
        %1061 = vmatpush.bf16.msra.mxu0 %v798
        %1062 = vmatmul.bf16.gmra.mxu0 %v410
        %v1063 = vpop.f32.mrf.mxu0
        %v1064 = vadd.f32 0.0, %v1063
        %v1065 = vpop.f32.mrf.mxu0
        %v1066 = vadd.f32 0.0, %v1065
        %1067 = vdwg.mxu0
        %1068 = vmatpush.bf16.msra.mxu0 %v918
        %1069 = vmatpush.bf16.msra.mxu0 %v910
        %1070 = vmatpush.bf16.msra.mxu0 %v902
        %1071 = vmatpush.bf16.msra.mxu0 %v894
        %1072 = vmatpush.bf16.msra.mxu0 %v886
        %1073 = vmatpush.bf16.msra.mxu0 %v878
        %1074 = vmatpush.bf16.msra.mxu0 %v870
        %1075 = vmatpush.bf16.msra.mxu0 %v862
        %1076 = vmatmul.bf16.gmra.mxu0 %v411
        %v1077 = vpop.f32.mrf.mxu0
        %v1078 = vadd.f32 %v1064, %v1077
        %v1079 = vpop.f32.mrf.mxu0
        %v1080 = vadd.f32 %v1066, %v1079
        %1081 = vdwg.mxu0
        %1082 = vmatpush.bf16.msra.mxu0 %v855
        %1083 = vmatpush.bf16.msra.mxu0 %v847
        %1084 = vmatpush.bf16.msra.mxu0 %v839
        %1085 = vmatpush.bf16.msra.mxu0 %v831
        %1086 = vmatpush.bf16.msra.mxu0 %v823
        %1087 = vmatpush.bf16.msra.mxu0 %v815
        %1088 = vmatpush.bf16.msra.mxu0 %v807
        %1089 = vmatpush.bf16.msra.mxu0 %v799
        %1090 = vmatmul.bf16.gmra.mxu0 %v410
        %v1091 = vpop.f32.mrf.mxu0
        %v1092 = vadd.f32 0.0, %v1091
        %v1093 = vpop.f32.mrf.mxu0
        %v1094 = vadd.f32 0.0, %v1093
        %1095 = vdwg.mxu0
        %1096 = vmatpush.bf16.msra.mxu0 %v919
        %1097 = vmatpush.bf16.msra.mxu0 %v911
        %1098 = vmatpush.bf16.msra.mxu0 %v903
        %1099 = vmatpush.bf16.msra.mxu0 %v895
        %1100 = vmatpush.bf16.msra.mxu0 %v887
        %1101 = vmatpush.bf16.msra.mxu0 %v879
        %1102 = vmatpush.bf16.msra.mxu0 %v871
        %1103 = vmatpush.bf16.msra.mxu0 %v863
        %1104 = vmatmul.bf16.gmra.mxu0 %v411
        %v1105 = vpop.f32.mrf.mxu0
        %v1106 = vadd.f32 %v1092, %v1105
        %v1107 = vpop.f32.mrf.mxu0
        %v1108 = vadd.f32 %v1094, %v1107
        %1109 = vdwg.mxu0
        %1110 = vmatpush.bf16.msra.mxu0 %v856
        %1111 = vmatpush.bf16.msra.mxu0 %v848
        %1112 = vmatpush.bf16.msra.mxu0 %v840
        %1113 = vmatpush.bf16.msra.mxu0 %v832
        %1114 = vmatpush.bf16.msra.mxu0 %v824
        %1115 = vmatpush.bf16.msra.mxu0 %v816
        %1116 = vmatpush.bf16.msra.mxu0 %v808
        %1117 = vmatpush.bf16.msra.mxu0 %v800
        %1118 = vmatmul.bf16.gmra.mxu0 %v410
        %v1119 = vpop.f32.mrf.mxu0
        %v1120 = vadd.f32 0.0, %v1119
        %v1121 = vpop.f32.mrf.mxu0
        %v1122 = vadd.f32 0.0, %v1121
        %1123 = vdwg.mxu0
        %1124 = vmatpush.bf16.msra.mxu0 %v920
        %1125 = vmatpush.bf16.msra.mxu0 %v912
        %1126 = vmatpush.bf16.msra.mxu0 %v904
        %1127 = vmatpush.bf16.msra.mxu0 %v896
        %1128 = vmatpush.bf16.msra.mxu0 %v888
        %1129 = vmatpush.bf16.msra.mxu0 %v880
        %1130 = vmatpush.bf16.msra.mxu0 %v872
        %1131 = vmatpush.bf16.msra.mxu0 %v864
        %1132 = vmatmul.bf16.gmra.mxu0 %v411
        %v1133 = vpop.f32.mrf.mxu0
        %v1134 = vadd.f32 %v1120, %v1133
        %v1135 = vpop.f32.mrf.mxu0
        %v1136 = vadd.f32 %v1122, %v1135
        %1137 = vdwg.mxu0
        %1138 = vmatpush.bf16.msra.mxu0 %v857
        %1139 = vmatpush.bf16.msra.mxu0 %v849
        %1140 = vmatpush.bf16.msra.mxu0 %v841
        %1141 = vmatpush.bf16.msra.mxu0 %v833
        %1142 = vmatpush.bf16.msra.mxu0 %v825
        %1143 = vmatpush.bf16.msra.mxu0 %v817
        %1144 = vmatpush.bf16.msra.mxu0 %v809
        %1145 = vmatpush.bf16.msra.mxu0 %v801
        %1146 = vmatmul.bf16.gmra.mxu0 %v410
        %v1147 = vpop.f32.mrf.mxu0
        %v1148 = vadd.f32 0.0, %v1147
        %v1149 = vpop.f32.mrf.mxu0
        %v1150 = vadd.f32 0.0, %v1149
        %1151 = vdwg.mxu0
        %1152 = vmatpush.bf16.msra.mxu0 %v921
        %1153 = vmatpush.bf16.msra.mxu0 %v913
        %1154 = vmatpush.bf16.msra.mxu0 %v905
        %1155 = vmatpush.bf16.msra.mxu0 %v897
        %1156 = vmatpush.bf16.msra.mxu0 %v889
        %1157 = vmatpush.bf16.msra.mxu0 %v881
        %1158 = vmatpush.bf16.msra.mxu0 %v873
        %1159 = vmatpush.bf16.msra.mxu0 %v865
        %1160 = vmatmul.bf16.gmra.mxu0 %v411
        %v1161 = vpop.f32.mrf.mxu0
        %v1162 = vadd.f32 %v1148, %v1161
        %v1163 = vpop.f32.mrf.mxu0
        %v1164 = vadd.f32 %v1150, %v1163
        %1165 = vdwg.mxu0
        %1166 = vmatpush.bf16.msra.mxu0 %v858
        %1167 = vmatpush.bf16.msra.mxu0 %v850
        %1168 = vmatpush.bf16.msra.mxu0 %v842
        %1169 = vmatpush.bf16.msra.mxu0 %v834
        %1170 = vmatpush.bf16.msra.mxu0 %v826
        %1171 = vmatpush.bf16.msra.mxu0 %v818
        %1172 = vmatpush.bf16.msra.mxu0 %v810
        %1173 = vmatpush.bf16.msra.mxu0 %v802
        %1174 = vmatmul.bf16.gmra.mxu0 %v410
        %v1175 = vpop.f32.mrf.mxu0
        %v1176 = vadd.f32 0.0, %v1175
        %v1177 = vpop.f32.mrf.mxu0
        %v1178 = vadd.f32 0.0, %v1177
        %1179 = vdwg.mxu0
        %1180 = vmatpush.bf16.msra.mxu0 %v922
        %1181 = vmatpush.bf16.msra.mxu0 %v914
        %1182 = vmatpush.bf16.msra.mxu0 %v906
        %1183 = vmatpush.bf16.msra.mxu0 %v898
        %1184 = vmatpush.bf16.msra.mxu0 %v890
        %1185 = vmatpush.bf16.msra.mxu0 %v882
        %1186 = vmatpush.bf16.msra.mxu0 %v874
        %1187 = vmatpush.bf16.msra.mxu0 %v866
        %1188 = vmatmul.bf16.gmra.mxu0 %v411
        %v1189 = vpop.f32.mrf.mxu0
        %v1190 = vadd.f32 %v1176, %v1189
        %v1191 = vpop.f32.mrf.mxu0
        %v1192 = vadd.f32 %v1178, %v1191
        %1193 = vdwg.mxu0
        %1194 = vmatpush.bf16.msra.mxu0 %v859
        %1195 = vmatpush.bf16.msra.mxu0 %v851
        %1196 = vmatpush.bf16.msra.mxu0 %v843
        %1197 = vmatpush.bf16.msra.mxu0 %v835
        %1198 = vmatpush.bf16.msra.mxu0 %v827
        %1199 = vmatpush.bf16.msra.mxu0 %v819
        %1200 = vmatpush.bf16.msra.mxu0 %v811
        %1201 = vmatpush.bf16.msra.mxu0 %v803
        %1202 = vmatmul.bf16.gmra.mxu0 %v410
        %v1203 = vpop.f32.mrf.mxu0
        %v1204 = vadd.f32 0.0, %v1203
        %v1205 = vpop.f32.mrf.mxu0
        %v1206 = vadd.f32 0.0, %v1205
        %1207 = vdwg.mxu0
        %1208 = vmatpush.bf16.msra.mxu0 %v923
        %1209 = vmatpush.bf16.msra.mxu0 %v915
        %1210 = vmatpush.bf16.msra.mxu0 %v907
        %1211 = vmatpush.bf16.msra.mxu0 %v899
        %1212 = vmatpush.bf16.msra.mxu0 %v891
        %1213 = vmatpush.bf16.msra.mxu0 %v883
        %1214 = vmatpush.bf16.msra.mxu0 %v875
        %1215 = vmatpush.bf16.msra.mxu0 %v867
        %1216 = vmatmul.bf16.gmra.mxu0 %v411
        %v1217 = vpop.f32.mrf.mxu0
        %v1218 = vadd.f32 %v1204, %v1217
        %v1219 = vpop.f32.mrf.mxu0
        %v1220 = vadd.f32 %v1206, %v1219
        %1221 = vdwg.mxu0
        %1222 = vmatpush.bf16.msra.mxu0 %v860
        %1223 = vmatpush.bf16.msra.mxu0 %v852
        %1224 = vmatpush.bf16.msra.mxu0 %v844
        %1225 = vmatpush.bf16.msra.mxu0 %v836
        %1226 = vmatpush.bf16.msra.mxu0 %v828
        %1227 = vmatpush.bf16.msra.mxu0 %v820
        %1228 = vmatpush.bf16.msra.mxu0 %v812
        %1229 = vmatpush.bf16.msra.mxu0 %v804
        %1230 = vmatmul.bf16.gmra.mxu0 %v410
        %v1231 = vpop.f32.mrf.mxu0
        %v1232 = vadd.f32 0.0, %v1231
        %v1233 = vpop.f32.mrf.mxu0
        %v1234 = vadd.f32 0.0, %v1233
        %1235 = vdwg.mxu0
        %1236 = vmatpush.bf16.msra.mxu0 %v924
        %1237 = vmatpush.bf16.msra.mxu0 %v916
        %1238 = vmatpush.bf16.msra.mxu0 %v908
        %1239 = vmatpush.bf16.msra.mxu0 %v900
        %1240 = vmatpush.bf16.msra.mxu0 %v892
        %1241 = vmatpush.bf16.msra.mxu0 %v884
        %1242 = vmatpush.bf16.msra.mxu0 %v876
        %1243 = vmatpush.bf16.msra.mxu0 %v868
        %1244 = vmatmul.bf16.gmra.mxu0 %v411
        %v1245 = vpop.f32.mrf.mxu0
        %v1246 = vadd.f32 %v1232, %v1245
        %v1247 = vpop.f32.mrf.mxu0
        %v1248 = vadd.f32 %v1234, %v1247
        %1249 = vdwg.mxu0
        %1250 = vmatpush.bf16.msra.mxu0 %v861
        %1251 = vmatpush.bf16.msra.mxu0 %v853
        %1252 = vmatpush.bf16.msra.mxu0 %v845
        %1253 = vmatpush.bf16.msra.mxu0 %v837
        %1254 = vmatpush.bf16.msra.mxu0 %v829
        %1255 = vmatpush.bf16.msra.mxu0 %v821
        %1256 = vmatpush.bf16.msra.mxu0 %v813
        %1257 = vmatpush.bf16.msra.mxu0 %v805
        %1258 = vmatmul.bf16.gmra.mxu0 %v410
        %v1259 = vpop.f32.mrf.mxu0
        %v1260 = vadd.f32 0.0, %v1259
        %v1261 = vpop.f32.mrf.mxu0
        %v1262 = vadd.f32 0.0, %v1261
        %1263 = vdwg.mxu0
        %1264 = vmatpush.bf16.msra.mxu0 %v925
        %1265 = vmatpush.bf16.msra.mxu0 %v917
        %1266 = vmatpush.bf16.msra.mxu0 %v909
        %1267 = vmatpush.bf16.msra.mxu0 %v901
        %1268 = vmatpush.bf16.msra.mxu0 %v893
        %1269 = vmatpush.bf16.msra.mxu0 %v885
        %1270 = vmatpush.bf16.msra.mxu0 %v877
        %1271 = vmatpush.bf16.msra.mxu0 %v869
        %1272 = vmatmul.bf16.gmra.mxu0 %v411
        %v1273 = vpop.f32.mrf.mxu0
        %v1274 = vadd.f32 %v1260, %v1273
        %v1275 = vpop.f32.mrf.mxu0
        %v1276 = vadd.f32 %v1262, %v1275
        %1277 = vdwg.mxu0
        %v1278 = vxor.u32 %v1078, 2147483648
        %v1279 = vxor.u32 %v1106, 2147483648
        %v1280 = vxor.u32 %v1134, 2147483648
        %v1281 = vxor.u32 %v1162, 2147483648
        %v1282 = vxor.u32 %v1080, 2147483648
        %v1283 = vxor.u32 %v1108, 2147483648
        %v1284 = vxor.u32 %v1136, 2147483648
        %v1285 = vxor.u32 %v1164, 2147483648
        %v1286 = vmul.f32 %v1278, 1.442695
        %v1287 = vpow.pop %v1286
        %v1288 = vmul.f32 %v1279, 1.442695
        %v1289 = vpow.pop %v1288
        %v1290 = vmul.f32 %v1280, 1.442695
        %v1291 = vpow.pop %v1290
        %v1292 = vmul.f32 %v1281, 1.442695
        %v1293 = vpow.pop %v1292
        %v1294 = vmul.f32 %v1282, 1.442695
        %v1295 = vpow.pop %v1294
        %v1296 = vmul.f32 %v1283, 1.442695
        %v1297 = vpow.pop %v1296
        %v1298 = vmul.f32 %v1284, 1.442695
        %v1299 = vpow.pop %v1298
        %v1300 = vmul.f32 %v1285, 1.442695
        %v1301 = vpow.pop %v1300
        %v1302 = vadd.f32 %v1287, 1.0
        %v1303 = vadd.f32 %v1289, 1.0
        %v1304 = vadd.f32 %v1291, 1.0
        %v1305 = vadd.f32 %v1293, 1.0
        %v1306 = vadd.f32 %v1295, 1.0
        %v1307 = vadd.f32 %v1297, 1.0
        %v1308 = vadd.f32 %v1299, 1.0
        %v1309 = vadd.f32 %v1301, 1.0
        %v1310 = vrcp.pop %v1302
        %v1311 = vmul.f32 %v1302, %v1310
        %v1312 = vsub.f32 1.0, %v1311
        %v1313 = vmul.f32 %v1310, %v1312
        %v1314 = vadd.f32 %v1310, %v1313
        %vm1315 = vweird.f32 %v1302
        %vm1316 = vweird.f32 %v1310
        %vm1317 = vmor %vm1315, %vm1316
        %v1318 = vsel %vm1317, %v1310, %v1314
        %v1319 = vand.u32 2147483647, %v1302
        %vm1320 = vcmp.eq.f32.partialorder %v1319, 8.507059e+37
        %v1321 = vand.u32 %v1302, 2147483648
        %v1322 = vor.u32 1.1754944e-38, %v1321
        %v1323 = vsel %vm1320, %v1322, %v1318
        %v1324 = vmul.f32 1.0, %v1323
        %v1325 = vrcp.pop %v1303
        %v1326 = vmul.f32 %v1303, %v1325
        %v1327 = vsub.f32 1.0, %v1326
        %v1328 = vmul.f32 %v1325, %v1327
        %v1329 = vadd.f32 %v1325, %v1328
        %vm1330 = vweird.f32 %v1303
        %vm1331 = vweird.f32 %v1325
        %vm1332 = vmor %vm1330, %vm1331
        %v1333 = vsel %vm1332, %v1325, %v1329
        %v1334 = vand.u32 2147483647, %v1303
        %vm1335 = vcmp.eq.f32.partialorder %v1334, 8.507059e+37
        %v1336 = vand.u32 %v1303, 2147483648
        %v1337 = vor.u32 1.1754944e-38, %v1336
        %v1338 = vsel %vm1335, %v1337, %v1333
        %v1339 = vmul.f32 1.0, %v1338
        %v1340 = vrcp.pop %v1304
        %v1341 = vmul.f32 %v1304, %v1340
        %v1342 = vsub.f32 1.0, %v1341
        %v1343 = vmul.f32 %v1340, %v1342
        %v1344 = vadd.f32 %v1340, %v1343
        %vm1345 = vweird.f32 %v1304
        %vm1346 = vweird.f32 %v1340
        %vm1347 = vmor %vm1345, %vm1346
        %v1348 = vsel %vm1347, %v1340, %v1344
        %v1349 = vand.u32 2147483647, %v1304
        %vm1350 = vcmp.eq.f32.partialorder %v1349, 8.507059e+37
        %v1351 = vand.u32 %v1304, 2147483648
        %v1352 = vor.u32 1.1754944e-38, %v1351
        %v1353 = vsel %vm1350, %v1352, %v1348
        %v1354 = vmul.f32 1.0, %v1353
        %v1355 = vrcp.pop %v1305
        %v1356 = vmul.f32 %v1305, %v1355
        %v1357 = vsub.f32 1.0, %v1356
        %v1358 = vmul.f32 %v1355, %v1357
        %v1359 = vadd.f32 %v1355, %v1358
        %vm1360 = vweird.f32 %v1305
        %vm1361 = vweird.f32 %v1355
        %vm1362 = vmor %vm1360, %vm1361
        %v1363 = vsel %vm1362, %v1355, %v1359
        %v1364 = vand.u32 2147483647, %v1305
        %vm1365 = vcmp.eq.f32.partialorder %v1364, 8.507059e+37
        %v1366 = vand.u32 %v1305, 2147483648
        %v1367 = vor.u32 1.1754944e-38, %v1366
        %v1368 = vsel %vm1365, %v1367, %v1363
        %v1369 = vmul.f32 1.0, %v1368
        %v1370 = vrcp.pop %v1306
        %v1371 = vmul.f32 %v1306, %v1370
        %v1372 = vsub.f32 1.0, %v1371
        %v1373 = vmul.f32 %v1370, %v1372
        %v1374 = vadd.f32 %v1370, %v1373
        %vm1375 = vweird.f32 %v1306
        %vm1376 = vweird.f32 %v1370
        %vm1377 = vmor %vm1375, %vm1376
        %v1378 = vsel %vm1377, %v1370, %v1374
        %v1379 = vand.u32 2147483647, %v1306
        %vm1380 = vcmp.eq.f32.partialorder %v1379, 8.507059e+37
        %v1381 = vand.u32 %v1306, 2147483648
        %v1382 = vor.u32 1.1754944e-38, %v1381
        %v1383 = vsel %vm1380, %v1382, %v1378
        %v1384 = vmul.f32 1.0, %v1383
        %v1385 = vrcp.pop %v1307
        %v1386 = vmul.f32 %v1307, %v1385
        %v1387 = vsub.f32 1.0, %v1386
        %v1388 = vmul.f32 %v1385, %v1387
        %v1389 = vadd.f32 %v1385, %v1388
        %vm1390 = vweird.f32 %v1307
        %vm1391 = vweird.f32 %v1385
        %vm1392 = vmor %vm1390, %vm1391
        %v1393 = vsel %vm1392, %v1385, %v1389
        %v1394 = vand.u32 2147483647, %v1307
        %vm1395 = vcmp.eq.f32.partialorder %v1394, 8.507059e+37
        %v1396 = vand.u32 %v1307, 2147483648
        %v1397 = vor.u32 1.1754944e-38, %v1396
        %v1398 = vsel %vm1395, %v1397, %v1393
        %v1399 = vmul.f32 1.0, %v1398
        %v1400 = vrcp.pop %v1308
        %v1401 = vmul.f32 %v1308, %v1400
        %v1402 = vsub.f32 1.0, %v1401
        %v1403 = vmul.f32 %v1400, %v1402
        %v1404 = vadd.f32 %v1400, %v1403
        %vm1405 = vweird.f32 %v1308
        %vm1406 = vweird.f32 %v1400
        %vm1407 = vmor %vm1405, %vm1406
        %v1408 = vsel %vm1407, %v1400, %v1404
        %v1409 = vand.u32 2147483647, %v1308
        %vm1410 = vcmp.eq.f32.partialorder %v1409, 8.507059e+37
        %v1411 = vand.u32 %v1308, 2147483648
        %v1412 = vor.u32 1.1754944e-38, %v1411
        %v1413 = vsel %vm1410, %v1412, %v1408
        %v1414 = vmul.f32 1.0, %v1413
        %v1415 = vrcp.pop %v1309
        %v1416 = vmul.f32 %v1309, %v1415
        %v1417 = vsub.f32 1.0, %v1416
        %v1418 = vmul.f32 %v1415, %v1417
        %v1419 = vadd.f32 %v1415, %v1418
        %vm1420 = vweird.f32 %v1309
        %vm1421 = vweird.f32 %v1415
        %vm1422 = vmor %vm1420, %vm1421
        %v1423 = vsel %vm1422, %v1415, %v1419
        %v1424 = vand.u32 2147483647, %v1309
        %vm1425 = vcmp.eq.f32.partialorder %v1424, 8.507059e+37
        %v1426 = vand.u32 %v1309, 2147483648
        %v1427 = vor.u32 1.1754944e-38, %v1426
        %v1428 = vsel %vm1425, %v1427, %v1423
        %v1429 = vmul.f32 1.0, %v1428
        %v1430 = vmul.f32 %v1078, %v1324
        %v1431 = vmul.f32 %v1106, %v1339
        %v1432 = vmul.f32 %v1134, %v1354
        %v1433 = vmul.f32 %v1162, %v1369
        %v1434 = vmul.f32 %v1080, %v1384
        %v1435 = vmul.f32 %v1108, %v1399
        %v1436 = vmul.f32 %v1136, %v1414
        %v1437 = vmul.f32 %v1164, %v1429
        %v1438 = vmul.f32 %v1430, %v1190
        %v1439 = vmul.f32 %v1431, %v1218
        %v1440 = vmul.f32 %v1432, %v1246
        %v1441 = vmul.f32 %v1433, %v1274
        %v1442 = vmul.f32 %v1434, %v1192
        %v1443 = vmul.f32 %v1435, %v1220
        %v1444 = vmul.f32 %v1436, %v1248
        %v1445 = vmul.f32 %v1437, %v1276
        %v1446 = vld [vmem:[#allocation2] sm:$0xff]
        %v1447 = vld [vmem:[#allocation2 + $0x8] sm:$0xff]
        %v1448 = vld [vmem:[#allocation2 + $0x10] sm:$0xff]
        %v1449 = vld [vmem:[#allocation2 + $0x18] sm:$0xff]
        %v1450 = vpack.c.bf16 %v1442, %v1438
        %v1451 = vpack.c.bf16 %v1443, %v1439
        %v1452 = vpack.c.bf16 %v1444, %v1440
        %v1453 = vpack.c.bf16 %v1445, %v1441
        %v1454 = vld [vmem:[%s238] sm:$0xff]
        %v1455 = vld [vmem:[%s238 + $0x8] sm:$0xff]
        %v1456 = vld [vmem:[%s238 + $0x10] sm:$0xff]
        %v1457 = vld [vmem:[%s238 + $0x18] sm:$0xff]
        %v1458 = vld [vmem:[%s238 + $0x20] sm:$0xff]
        %v1459 = vld [vmem:[%s238 + $0x28] sm:$0xff]
        %v1460 = vld [vmem:[%s238 + $0x30] sm:$0xff]
        %v1461 = vld [vmem:[%s238 + $0x38] sm:$0xff]
        %v1462 = vld [vmem:[%s238 + $0x40] sm:$0xff]
        %v1463 = vld [vmem:[%s238 + $0x48] sm:$0xff]
        %v1464 = vld [vmem:[%s238 + $0x50] sm:$0xff]
        %v1465 = vld [vmem:[%s238 + $0x58] sm:$0xff]
        %v1466 = vld [vmem:[%s238 + $0x60] sm:$0xff]
        %v1467 = vld [vmem:[%s238 + $0x68] sm:$0xff]
        %v1468 = vld [vmem:[%s238 + $0x70] sm:$0xff]
        %v1469 = vld [vmem:[%s238 + $0x78] sm:$0xff]
        %v1470 = vld [vmem:[%s238 + $0x80] sm:$0xff]
        %v1471 = vld [vmem:[%s238 + $0x88] sm:$0xff]
        %v1472 = vld [vmem:[%s238 + $0x90] sm:$0xff]
        %v1473 = vld [vmem:[%s238 + $0x98] sm:$0xff]
        %v1474 = vld [vmem:[%s238 + $0xa0] sm:$0xff]
        %v1475 = vld [vmem:[%s238 + $0xa8] sm:$0xff]
        %v1476 = vld [vmem:[%s238 + $0xb0] sm:$0xff]
        %v1477 = vld [vmem:[%s238 + $0xb8] sm:$0xff]
        %v1478 = vld [vmem:[%s238 + $0xc0] sm:$0xff]
        %v1479 = vld [vmem:[%s238 + $0xc8] sm:$0xff]
        %v1480 = vld [vmem:[%s238 + $0xd0] sm:$0xff]
        %v1481 = vld [vmem:[%s238 + $0xd8] sm:$0xff]
        %v1482 = vld [vmem:[%s238 + $0xe0] sm:$0xff]
        %v1483 = vld [vmem:[%s238 + $0xe8] sm:$0xff]
        %v1484 = vld [vmem:[%s238 + $0xf0] sm:$0xff]
        %v1485 = vld [vmem:[%s238 + $0xf8] sm:$0xff]
        %v1486 = vld [vmem:[%s238 + $0x100] sm:$0xff]
        %v1487 = vld [vmem:[%s238 + $0x108] sm:$0xff]
        %v1488 = vld [vmem:[%s238 + $0x110] sm:$0xff]
        %v1489 = vld [vmem:[%s238 + $0x118] sm:$0xff]
        %v1490 = vld [vmem:[%s238 + $0x120] sm:$0xff]
        %v1491 = vld [vmem:[%s238 + $0x128] sm:$0xff]
        %v1492 = vld [vmem:[%s238 + $0x130] sm:$0xff]
        %v1493 = vld [vmem:[%s238 + $0x138] sm:$0xff]
        %v1494 = vld [vmem:[%s238 + $0x140] sm:$0xff]
        %v1495 = vld [vmem:[%s238 + $0x148] sm:$0xff]
        %v1496 = vld [vmem:[%s238 + $0x150] sm:$0xff]
        %v1497 = vld [vmem:[%s238 + $0x158] sm:$0xff]
        %v1498 = vld [vmem:[%s238 + $0x160] sm:$0xff]
        %v1499 = vld [vmem:[%s238 + $0x168] sm:$0xff]
        %v1500 = vld [vmem:[%s238 + $0x170] sm:$0xff]
        %v1501 = vld [vmem:[%s238 + $0x178] sm:$0xff]
        %v1502 = vld [vmem:[%s238 + $0x180] sm:$0xff]
        %v1503 = vld [vmem:[%s238 + $0x188] sm:$0xff]
        %v1504 = vld [vmem:[%s238 + $0x190] sm:$0xff]
        %v1505 = vld [vmem:[%s238 + $0x198] sm:$0xff]
        %v1506 = vld [vmem:[%s238 + $0x1a0] sm:$0xff]
        %v1507 = vld [vmem:[%s238 + $0x1a8] sm:$0xff]
        %v1508 = vld [vmem:[%s238 + $0x1b0] sm:$0xff]
        %v1509 = vld [vmem:[%s238 + $0x1b8] sm:$0xff]
        %v1510 = vld [vmem:[%s238 + $0x1c0] sm:$0xff]
        %v1511 = vld [vmem:[%s238 + $0x1c8] sm:$0xff]
        %v1512 = vld [vmem:[%s238 + $0x1d0] sm:$0xff]
        %v1513 = vld [vmem:[%s238 + $0x1d8] sm:$0xff]
        %v1514 = vld [vmem:[%s238 + $0x1e0] sm:$0xff]
        %v1515 = vld [vmem:[%s238 + $0x1e8] sm:$0xff]
        %v1516 = vld [vmem:[%s238 + $0x1f0] sm:$0xff]
        %v1517 = vld [vmem:[%s238 + $0x1f8] sm:$0xff]
        %v1582 = vunpack.c.l.b16 %v1454
        %v1583 = vunpack.c.h.b16 %v1454
        %v1584 = vunpack.c.l.b16 %v1455
        %v1585 = vunpack.c.h.b16 %v1455
        %v1586 = vunpack.c.l.b16 %v1456
        %v1587 = vunpack.c.h.b16 %v1456
        %v1588 = vunpack.c.l.b16 %v1457
        %v1589 = vunpack.c.h.b16 %v1457
        %v1590 = vunpack.c.l.b16 %v1458
        %v1591 = vunpack.c.h.b16 %v1458
        %v1592 = vunpack.c.l.b16 %v1459
        %v1593 = vunpack.c.h.b16 %v1459
        %v1594 = vunpack.c.l.b16 %v1460
        %v1595 = vunpack.c.h.b16 %v1460
        %v1596 = vunpack.c.l.b16 %v1461
        %v1597 = vunpack.c.h.b16 %v1461
        %v1598 = vunpack.c.l.b16 %v1462
        %v1599 = vunpack.c.h.b16 %v1462
        %v1600 = vunpack.c.l.b16 %v1463
        %v1601 = vunpack.c.h.b16 %v1463
        %v1602 = vunpack.c.l.b16 %v1464
        %v1603 = vunpack.c.h.b16 %v1464
        %v1604 = vunpack.c.l.b16 %v1465
        %v1605 = vunpack.c.h.b16 %v1465
        %v1606 = vunpack.c.l.b16 %v1466
        %v1607 = vunpack.c.h.b16 %v1466
        %v1608 = vunpack.c.l.b16 %v1467
        %v1609 = vunpack.c.h.b16 %v1467
        %v1610 = vunpack.c.l.b16 %v1468
        %v1611 = vunpack.c.h.b16 %v1468
        %v1612 = vunpack.c.l.b16 %v1469
        %v1613 = vunpack.c.h.b16 %v1469
        %v1614 = vunpack.c.l.b16 %v1470
        %v1615 = vunpack.c.h.b16 %v1470
        %v1616 = vunpack.c.l.b16 %v1471
        %v1617 = vunpack.c.h.b16 %v1471
        %v1618 = vunpack.c.l.b16 %v1472
        %v1619 = vunpack.c.h.b16 %v1472
        %v1620 = vunpack.c.l.b16 %v1473
        %v1621 = vunpack.c.h.b16 %v1473
        %v1622 = vunpack.c.l.b16 %v1474
        %v1623 = vunpack.c.h.b16 %v1474
        %v1624 = vunpack.c.l.b16 %v1475
        %v1625 = vunpack.c.h.b16 %v1475
        %v1626 = vunpack.c.l.b16 %v1476
        %v1627 = vunpack.c.h.b16 %v1476
        %v1628 = vunpack.c.l.b16 %v1477
        %v1629 = vunpack.c.h.b16 %v1477
        %v1630 = vunpack.c.l.b16 %v1478
        %v1631 = vunpack.c.h.b16 %v1478
        %v1632 = vunpack.c.l.b16 %v1479
        %v1633 = vunpack.c.h.b16 %v1479
        %v1634 = vunpack.c.l.b16 %v1480
        %v1635 = vunpack.c.h.b16 %v1480
        %v1636 = vunpack.c.l.b16 %v1481
        %v1637 = vunpack.c.h.b16 %v1481
        %v1638 = vunpack.c.l.b16 %v1482
        %v1639 = vunpack.c.h.b16 %v1482
        %v1640 = vunpack.c.l.b16 %v1483
        %v1641 = vunpack.c.h.b16 %v1483
        %v1642 = vunpack.c.l.b16 %v1484
        %v1643 = vunpack.c.h.b16 %v1484
        %v1644 = vunpack.c.l.b16 %v1485
        %v1645 = vunpack.c.h.b16 %v1485
        %v1646 = vunpack.c.l.b16 %v1486
        %v1647 = vunpack.c.h.b16 %v1486
        %v1648 = vunpack.c.l.b16 %v1487
        %v1649 = vunpack.c.h.b16 %v1487
        %v1650 = vunpack.c.l.b16 %v1488
        %v1651 = vunpack.c.h.b16 %v1488
        %v1652 = vunpack.c.l.b16 %v1489
        %v1653 = vunpack.c.h.b16 %v1489
        %v1654 = vunpack.c.l.b16 %v1490
        %v1655 = vunpack.c.h.b16 %v1490
        %v1656 = vunpack.c.l.b16 %v1491
        %v1657 = vunpack.c.h.b16 %v1491
        %v1658 = vunpack.c.l.b16 %v1492
        %v1659 = vunpack.c.h.b16 %v1492
        %v1660 = vunpack.c.l.b16 %v1493
        %v1661 = vunpack.c.h.b16 %v1493
        %v1662 = vunpack.c.l.b16 %v1494
        %v1663 = vunpack.c.h.b16 %v1494
        %v1664 = vunpack.c.l.b16 %v1495
        %v1665 = vunpack.c.h.b16 %v1495
        %v1666 = vunpack.c.l.b16 %v1496
        %v1667 = vunpack.c.h.b16 %v1496
        %v1668 = vunpack.c.l.b16 %v1497
        %v1669 = vunpack.c.h.b16 %v1497
        %v1670 = vunpack.c.l.b16 %v1498
        %v1671 = vunpack.c.h.b16 %v1498
        %v1672 = vunpack.c.l.b16 %v1499
        %v1673 = vunpack.c.h.b16 %v1499
        %v1674 = vunpack.c.l.b16 %v1500
        %v1675 = vunpack.c.h.b16 %v1500
        %v1676 = vunpack.c.l.b16 %v1501
        %v1677 = vunpack.c.h.b16 %v1501
        %v1678 = vunpack.c.l.b16 %v1502
        %v1679 = vunpack.c.h.b16 %v1502
        %v1680 = vunpack.c.l.b16 %v1503
        %v1681 = vunpack.c.h.b16 %v1503
        %v1682 = vunpack.c.l.b16 %v1504
        %v1683 = vunpack.c.h.b16 %v1504
        %v1684 = vunpack.c.l.b16 %v1505
        %v1685 = vunpack.c.h.b16 %v1505
        %v1686 = vunpack.c.l.b16 %v1506
        %v1687 = vunpack.c.h.b16 %v1506
        %v1688 = vunpack.c.l.b16 %v1507
        %v1689 = vunpack.c.h.b16 %v1507
        %v1690 = vunpack.c.l.b16 %v1508
        %v1691 = vunpack.c.h.b16 %v1508
        %v1692 = vunpack.c.l.b16 %v1509
        %v1693 = vunpack.c.h.b16 %v1509
        %v1694 = vunpack.c.l.b16 %v1510
        %v1695 = vunpack.c.h.b16 %v1510
        %v1696 = vunpack.c.l.b16 %v1511
        %v1697 = vunpack.c.h.b16 %v1511
        %v1698 = vunpack.c.l.b16 %v1512
        %v1699 = vunpack.c.h.b16 %v1512
        %v1700 = vunpack.c.l.b16 %v1513
        %v1701 = vunpack.c.h.b16 %v1513
        %v1702 = vunpack.c.l.b16 %v1514
        %v1703 = vunpack.c.h.b16 %v1514
        %v1704 = vunpack.c.l.b16 %v1515
        %v1705 = vunpack.c.h.b16 %v1515
        %v1706 = vunpack.c.l.b16 %v1516
        %v1707 = vunpack.c.h.b16 %v1516
        %v1708 = vunpack.c.l.b16 %v1517
        %v1709 = vunpack.c.h.b16 %v1517
        %v1710 = vpack.c.b16 %v1584, %v1582
        %v1711 = vpack.c.b16 %v1585, %v1583
        %v1712 = vpack.c.b16 %v1588, %v1586
        %v1713 = vpack.c.b16 %v1589, %v1587
        %v1714 = vpack.c.b16 %v1592, %v1590
        %v1715 = vpack.c.b16 %v1593, %v1591
        %v1716 = vpack.c.b16 %v1596, %v1594
        %v1717 = vpack.c.b16 %v1597, %v1595
        %v1718 = vpack.c.b16 %v1600, %v1598
        %v1719 = vpack.c.b16 %v1601, %v1599
        %v1720 = vpack.c.b16 %v1604, %v1602
        %v1721 = vpack.c.b16 %v1605, %v1603
        %v1722 = vpack.c.b16 %v1608, %v1606
        %v1723 = vpack.c.b16 %v1609, %v1607
        %v1724 = vpack.c.b16 %v1612, %v1610
        %v1725 = vpack.c.b16 %v1613, %v1611
        %v1726 = vpack.c.b16 %v1616, %v1614
        %v1727 = vpack.c.b16 %v1617, %v1615
        %v1728 = vpack.c.b16 %v1620, %v1618
        %v1729 = vpack.c.b16 %v1621, %v1619
        %v1730 = vpack.c.b16 %v1624, %v1622
        %v1731 = vpack.c.b16 %v1625, %v1623
        %v1732 = vpack.c.b16 %v1628, %v1626
        %v1733 = vpack.c.b16 %v1629, %v1627
        %v1734 = vpack.c.b16 %v1632, %v1630
        %v1735 = vpack.c.b16 %v1633, %v1631
        %v1736 = vpack.c.b16 %v1636, %v1634
        %v1737 = vpack.c.b16 %v1637, %v1635
        %v1738 = vpack.c.b16 %v1640, %v1638
        %v1739 = vpack.c.b16 %v1641, %v1639
        %v1740 = vpack.c.b16 %v1644, %v1642
        %v1741 = vpack.c.b16 %v1645, %v1643
        %v1742 = vpack.c.b16 %v1648, %v1646
        %v1743 = vpack.c.b16 %v1649, %v1647
        %v1744 = vpack.c.b16 %v1652, %v1650
        %v1745 = vpack.c.b16 %v1653, %v1651
        %v1746 = vpack.c.b16 %v1656, %v1654
        %v1747 = vpack.c.b16 %v1657, %v1655
        %v1748 = vpack.c.b16 %v1660, %v1658
        %v1749 = vpack.c.b16 %v1661, %v1659
        %v1750 = vpack.c.b16 %v1664, %v1662
        %v1751 = vpack.c.b16 %v1665, %v1663
        %v1752 = vpack.c.b16 %v1668, %v1666
        %v1753 = vpack.c.b16 %v1669, %v1667
        %v1754 = vpack.c.b16 %v1672, %v1670
        %v1755 = vpack.c.b16 %v1673, %v1671
        %v1756 = vpack.c.b16 %v1676, %v1674
        %v1757 = vpack.c.b16 %v1677, %v1675
        %v1758 = vpack.c.b16 %v1680, %v1678
        %v1759 = vpack.c.b16 %v1681, %v1679
        %v1760 = vpack.c.b16 %v1684, %v1682
        %v1761 = vpack.c.b16 %v1685, %v1683
        %v1762 = vpack.c.b16 %v1688, %v1686
        %v1763 = vpack.c.b16 %v1689, %v1687
        %v1764 = vpack.c.b16 %v1692, %v1690
        %v1765 = vpack.c.b16 %v1693, %v1691
        %v1766 = vpack.c.b16 %v1696, %v1694
        %v1767 = vpack.c.b16 %v1697, %v1695
        %v1768 = vpack.c.b16 %v1700, %v1698
        %v1769 = vpack.c.b16 %v1701, %v1699
        %v1770 = vpack.c.b16 %v1704, %v1702
        %v1771 = vpack.c.b16 %v1705, %v1703
        %v1772 = vpack.c.b16 %v1708, %v1706
        %v1773 = vpack.c.b16 %v1709, %v1707
        %1838 = vmatpush.bf16.msra.mxu0 %v1724
        %1839 = vmatpush.bf16.msra.mxu0 %v1722
        %1840 = vmatpush.bf16.msra.mxu0 %v1720
        %1841 = vmatpush.bf16.msra.mxu0 %v1718
        %1842 = vmatpush.bf16.msra.mxu0 %v1716
        %1843 = vmatpush.bf16.msra.mxu0 %v1714
        %1844 = vmatpush.bf16.msra.mxu0 %v1712
        %1845 = vmatpush.bf16.msra.mxu0 %v1710
        %1846 = vmatmul.bf16.gmra.mxu0 %v1450
        %v1847 = vpop.f32.mrf.mxu0
        %v1848 = vadd.f32 0.0, %v1847
        %v1849 = vpop.f32.mrf.mxu0
        %v1850 = vadd.f32 0.0, %v1849
        %1851 = vdwg.mxu0
        %1852 = vmatpush.bf16.msra.mxu0 %v1740
        %1853 = vmatpush.bf16.msra.mxu0 %v1738
        %1854 = vmatpush.bf16.msra.mxu0 %v1736
        %1855 = vmatpush.bf16.msra.mxu0 %v1734
        %1856 = vmatpush.bf16.msra.mxu0 %v1732
        %1857 = vmatpush.bf16.msra.mxu0 %v1730
        %1858 = vmatpush.bf16.msra.mxu0 %v1728
        %1859 = vmatpush.bf16.msra.mxu0 %v1726
        %1860 = vmatmul.bf16.gmra.mxu0 %v1451
        %v1861 = vpop.f32.mrf.mxu0
        %v1862 = vadd.f32 %v1848, %v1861
        %v1863 = vpop.f32.mrf.mxu0
        %v1864 = vadd.f32 %v1850, %v1863
        %1865 = vdwg.mxu0
        %1866 = vmatpush.bf16.msra.mxu0 %v1756
        %1867 = vmatpush.bf16.msra.mxu0 %v1754
        %1868 = vmatpush.bf16.msra.mxu0 %v1752
        %1869 = vmatpush.bf16.msra.mxu0 %v1750
        %1870 = vmatpush.bf16.msra.mxu0 %v1748
        %1871 = vmatpush.bf16.msra.mxu0 %v1746
        %1872 = vmatpush.bf16.msra.mxu0 %v1744
        %1873 = vmatpush.bf16.msra.mxu0 %v1742
        %1874 = vmatmul.bf16.gmra.mxu0 %v1452
        %v1875 = vpop.f32.mrf.mxu0
        %v1876 = vadd.f32 %v1862, %v1875
        %v1877 = vpop.f32.mrf.mxu0
        %v1878 = vadd.f32 %v1864, %v1877
        %1879 = vdwg.mxu0
        %1880 = vmatpush.bf16.msra.mxu0 %v1772
        %1881 = vmatpush.bf16.msra.mxu0 %v1770
        %1882 = vmatpush.bf16.msra.mxu0 %v1768
        %1883 = vmatpush.bf16.msra.mxu0 %v1766
        %1884 = vmatpush.bf16.msra.mxu0 %v1764
        %1885 = vmatpush.bf16.msra.mxu0 %v1762
        %1886 = vmatpush.bf16.msra.mxu0 %v1760
        %1887 = vmatpush.bf16.msra.mxu0 %v1758
        %1888 = vmatmul.bf16.gmra.mxu0 %v1453
        %v1889 = vpop.f32.mrf.mxu0
        %v1890 = vadd.f32 %v1876, %v1889
        %v1891 = vpop.f32.mrf.mxu0
        %v1892 = vadd.f32 %v1878, %v1891
        %1893 = vdwg.mxu0
        %1894 = vmatpush.bf16.msra.mxu0 %v1725
        %1895 = vmatpush.bf16.msra.mxu0 %v1723
        %1896 = vmatpush.bf16.msra.mxu0 %v1721
        %1897 = vmatpush.bf16.msra.mxu0 %v1719
        %1898 = vmatpush.bf16.msra.mxu0 %v1717
        %1899 = vmatpush.bf16.msra.mxu0 %v1715
        %1900 = vmatpush.bf16.msra.mxu0 %v1713
        %1901 = vmatpush.bf16.msra.mxu0 %v1711
        %1902 = vmatmul.bf16.gmra.mxu0 %v1450
        %v1903 = vpop.f32.mrf.mxu0
        %v1904 = vadd.f32 0.0, %v1903
        %v1905 = vpop.f32.mrf.mxu0
        %v1906 = vadd.f32 0.0, %v1905
        %1907 = vdwg.mxu0
        %1908 = vmatpush.bf16.msra.mxu0 %v1741
        %1909 = vmatpush.bf16.msra.mxu0 %v1739
        %1910 = vmatpush.bf16.msra.mxu0 %v1737
        %1911 = vmatpush.bf16.msra.mxu0 %v1735
        %1912 = vmatpush.bf16.msra.mxu0 %v1733
        %1913 = vmatpush.bf16.msra.mxu0 %v1731
        %1914 = vmatpush.bf16.msra.mxu0 %v1729
        %1915 = vmatpush.bf16.msra.mxu0 %v1727
        %1916 = vmatmul.bf16.gmra.mxu0 %v1451
        %v1917 = vpop.f32.mrf.mxu0
        %v1918 = vadd.f32 %v1904, %v1917
        %v1919 = vpop.f32.mrf.mxu0
        %v1920 = vadd.f32 %v1906, %v1919
        %1921 = vdwg.mxu0
        %1922 = vmatpush.bf16.msra.mxu0 %v1757
        %1923 = vmatpush.bf16.msra.mxu0 %v1755
        %1924 = vmatpush.bf16.msra.mxu0 %v1753
        %1925 = vmatpush.bf16.msra.mxu0 %v1751
        %1926 = vmatpush.bf16.msra.mxu0 %v1749
        %1927 = vmatpush.bf16.msra.mxu0 %v1747
        %1928 = vmatpush.bf16.msra.mxu0 %v1745
        %1929 = vmatpush.bf16.msra.mxu0 %v1743
        %1930 = vmatmul.bf16.gmra.mxu0 %v1452
        %v1931 = vpop.f32.mrf.mxu0
        %v1932 = vadd.f32 %v1918, %v1931
        %v1933 = vpop.f32.mrf.mxu0
        %v1934 = vadd.f32 %v1920, %v1933
        %1935 = vdwg.mxu0
        %1936 = vmatpush.bf16.msra.mxu0 %v1773
        %1937 = vmatpush.bf16.msra.mxu0 %v1771
        %1938 = vmatpush.bf16.msra.mxu0 %v1769
        %1939 = vmatpush.bf16.msra.mxu0 %v1767
        %1940 = vmatpush.bf16.msra.mxu0 %v1765
        %1941 = vmatpush.bf16.msra.mxu0 %v1763
        %1942 = vmatpush.bf16.msra.mxu0 %v1761
        %1943 = vmatpush.bf16.msra.mxu0 %v1759
        %1944 = vmatmul.bf16.gmra.mxu0 %v1453
        %v1945 = vpop.f32.mrf.mxu0
        %v1946 = vadd.f32 %v1932, %v1945
        %v1947 = vpop.f32.mrf.mxu0
        %v1948 = vadd.f32 %v1934, %v1947
        %1949 = vdwg.mxu0
        %v1950 = vadd.f32 %v1446, %v1890
        %v1951 = vadd.f32 %v1447, %v1946
        %v1952 = vadd.f32 %v1448, %v1892
        %v1953 = vadd.f32 %v1449, %v1948
        %1954 = vst [vmem:[#allocation2] sm:$0xff] %v1950
        %1955 = vst [vmem:[#allocation2 + $0x8] sm:$0xff] %v1951
        %1956 = vst [vmem:[#allocation2 + $0x10] sm:$0xff] %v1952
        %1957 = vst [vmem:[#allocation2 + $0x18] sm:$0xff] %v1953
        %p1958 = scmp.eq.s32.totalorder %s24, 1
        // Predicated region
        $region49: #{tpu_custom_call.1} parent=31 // pred_check
          %p1959 = pneg %p1958
        $region50: #{tpu_custom_call.1} parent=31 // pred_check_branch
          %1961 = sbr.rel (%p1959) target = $region52
        $region51: #{tpu_custom_call.1} parent=31 // pred_region
          %v1962 = vld [vmem:[#allocation2] sm:$0xff]
          %v1963 = vld [vmem:[#allocation2 + $0x8] sm:$0xff]
          %v1964 = vld [vmem:[#allocation2 + $0x10] sm:$0xff]
          %v1965 = vld [vmem:[#allocation2 + $0x18] sm:$0xff]
          %1966 = vst [vmem:[#allocation9] sm:$0xff] %v1962
          %1967 = vst [vmem:[#allocation9 + $0x8] sm:$0xff] %v1963
          %1968 = vst [vmem:[#allocation9 + $0x10] sm:$0xff] %v1964
          %1969 = vst [vmem:[#allocation9 + $0x18] sm:$0xff] %v1965
        $region52: #{tpu_custom_call.1} parent=31 // pred_fallthru
          _
        // Predicated region
        $region53: #{tpu_custom_call.1} parent=31 // pred_check
          %p1970 = pneg %p127
        $region54: #{tpu_custom_call.1} parent=31 // pred_check_branch
          %1972 = sbr.rel (%p1970) target = $region56
        $region55: #{tpu_custom_call.1} parent=31 // pred_region
          %s1973 = smul.u32 2, %s23
          %1975 = vsyncadd [#allocation5], 0
          %s1976 = smul.addr %s1973, 2
          %s1977 = smul.addr %s1976, 8
          %s1978 = scalar_lea.hbm %s3, %s1977
          %s1979 = sshll.u32 [#allocation9], 4
          %s1980 = int_to_ptr.vmem [resolvable:$true] %s1979
          %s1981 = sshll.u32 %s1978, 4
          %s1982 = int_to_ptr.hbm [resolvable:$true] %s1981
          %1987 = dma.vmem_to_hbm [thread:$0]  %s1980, 512, %s1982, [#allocation5], 256, 256, 16
        $region56: #{tpu_custom_call.1} parent=31 // pred_fallthru
          _
        // Predicated region
        $region57: #{tpu_custom_call.1} parent=31 // pred_check
          %p1988 = pneg %p127
        $region58: #{tpu_custom_call.1} parent=31 // pred_check_branch
          %1990 = sbr.rel (%p1988) target = $region60
        $region59: #{tpu_custom_call.1} parent=31 // pred_region
          %1992 = dma.done [#allocation5], 512
        $region60: #{tpu_custom_call.1} parent=31 // pred_fallthru
          _
      $region32: #{tpu_custom_call.1} parent=5 // pred_fallthru
        _
      %p1993 = scmp.le.s32.totalorder 2, %s14
      // Predicated region
      $region61: #{tpu_custom_call.1} parent=5 // pred_check
        %p1994 = pneg %p1993
      $region62: #{tpu_custom_call.1} parent=5 // pred_check_branch
        %1996 = sbr.rel (%p1994) target = $region64
      $region63: #{tpu_custom_call.1} parent=5 // pred_region
        %s1997 = ssub.s32 %s14, 2
      $region64: #{tpu_custom_call.1} parent=5 // pred_fallthru
        _
    $region6: #{tpu_custom_call.1} parent=1 // loop_footer
      %s18 = sadd.s32 1, %s14
    $region7: #{tpu_custom_call.1} parent=1 // loop_footer_branch
      %13 = sbr.rel target = $region3
    $region8: #{tpu_custom_call.1} parent=1 // loop_exit
      _
    %1998 = vsyncpa [#allocation4], 1
    %s1999 = scalar_lea.sflag [#allocation4], 1
    %2000 = vsyncpa %s1999, 1
    %2001 = vsyncpa [#allocation7], 1
    %s2002 = scalar_lea.sflag [#allocation7], 1
    %2003 = vsyncpa %s2002, 1
    %2004 = vsyncpa [#allocation5], 1
    %s2005 = scalar_lea.sflag [#allocation5], 1
    %2006 = vsyncpa %s2005, 1

</llo_original>
